<compile_context>
chip_gen: v7x
topology: tpu7x:2x2x1
jax: 0.10.0
libtpu: 0.0.40
codegen_flags: <defaults>
</compile_context>

<pallas_src>
import jax
import jax.numpy as jnp
from jax.experimental import pallas as pl
from jax.experimental.pallas import tpu as pltpu

# Small, self-consistent shapes for the synthetic run.
BATCH = 8
SEQ = 8
HIDDEN = 32          # hidden_size (4*HIDDEN = 128 -> lane-dense gate matmuls)
VOCAB = 128          # input_size (embedding rows)
OUTPUT = 128         # output_size of the final fc
NUM_LAYERS = 2


# ----------------------------------------------------------------------------
# Fused kernel: 2-layer LSTM + FC.  PyTorch gate order i, f, g, o.
#   gates = x @ W_ih^T + h @ W_hh^T + (b_ih + b_hh)   (weights pre-transposed)
# ----------------------------------------------------------------------------
def _char_rnn_kernel(x_ref, w_ih0_ref, w_hh0_ref, b0_ref,
                     w_ih1_ref, w_hh1_ref, b1_ref,
                     w_fc_ref, b_fc_ref, h0_ref, c0_ref,
                     out_ref, hN_ref, cN_ref,
                     y2_s):
    T, B, H = x_ref.shape
    G = 4 * H

    w_ih = (w_ih0_ref, w_ih1_ref)
    w_hh = (w_hh0_ref, w_hh1_ref)
    bias = (b0_ref, b1_ref)

    def lstm_layer(layer, x_all_bf16):
        # Hoisted input projection for all timesteps at once:
        # (T*B, H) @ (H, 4H) + combined bias  -> gate pre-activations.
        # Kept as a value (8 f32 vregs), sliced at static vreg boundaries below.
        gx = (jnp.dot(x_all_bf16, w_ih[layer][...],
                      preferred_element_type=jnp.float32)
              + bias[layer][...])                       # (T*B, 4H) f32

        w_hh_l = w_hh[layer][...]                       # (H, 4H) bf16, resident
        h = h0_ref[layer]                               # (B, H) f32
        c = c0_ref[layer]
        hs = []                                         # layer-0 outputs (values)
        for t in range(T):                              # fully unrolled, static idx
            gates = gx[t * B:(t + 1) * B, :] + jnp.dot(
                h.astype(jnp.bfloat16), w_hh_l,
                preferred_element_type=jnp.float32)     # (B, 4H) f32
            sg = jax.nn.sigmoid(gates)                  # full (8,128) vreg -> 1 EUP push
            th = jnp.tanh(gates)                        # full (8,128) vreg -> 1 EUP push
            i_g = sg[:, 0 * H:1 * H]
            f_g = sg[:, 1 * H:2 * H]
            g_g = th[:, 2 * H:3 * H]
            o_g = sg[:, 3 * H:4 * H]
            c = f_g * c + i_g * g_g
            h = o_g * jnp.tanh(c)
            if layer == 0:
                hs.append(h)                            # stays in vregs
            else:
                y2_s[:, t, :] = h                       # batch-first (b,t) row order
        hN_ref[layer] = h                               # written once, after the loop
        cN_ref[layer] = c
        return hs

    # Layer 0: input already resident in VMEM, time-major (T, B, H).
    hs0 = lstm_layer(0, x_ref[...].reshape(T * B, H).astype(jnp.bfloat16))

    # Layer 1: consumes layer-0 hidden states straight from vregs.
    # Time-major concat (row order t*B + b) matches the gx slicing above.
    x1 = jnp.concatenate(hs0, axis=0).astype(jnp.bfloat16)   # (T*B, H)
    lstm_layer(1, x1)

    # FC epilogue: one (B*T, H) @ (H, O) matmul, single lane-dense (64,128) store.
    y2_all = y2_s[...].reshape(B * T, H).astype(jnp.bfloat16)
    out_ref[...] = (jnp.dot(y2_all, w_fc_ref[...],
                            preferred_element_type=jnp.float32)
                    + b_fc_ref[...])


def _char_rnn_pallas(emb_tbh, params, h0, c0):
    T, B, H = emb_tbh.shape
    return pl.pallas_call(
        _char_rnn_kernel,
        out_shape=(
            jax.ShapeDtypeStruct((B * T, OUTPUT), jnp.float32),          # fc out
            jax.ShapeDtypeStruct((NUM_LAYERS, B, H), jnp.float32),       # h_n
            jax.ShapeDtypeStruct((NUM_LAYERS, B, H), jnp.float32),       # c_n
        ),
        scratch_shapes=[
            pltpu.VMEM((B, T, H), jnp.float32),   # layer-1 hidden states (batch-first)
        ],
    )(emb_tbh,
      params["w_ih_0"], params["w_hh_0"], params["b_0"],
      params["w_ih_1"], params["w_hh_1"], params["b_1"],
      params["w_fc"], params["b_fc"], h0, c0)


# ----------------------------------------------------------------------------
# Full CharRNN forward
# ----------------------------------------------------------------------------
@jax.jit
def char_rnn_forward(token_ids, hidden, params):
    """token_ids: (B, T) int32; hidden: ((L,B,H), (L,B,H)).
    Returns (out (B*T, OUTPUT), (h_n, c_n)) like the PyTorch module."""
    h0, c0 = hidden
    # Embedding lookup (gather) — plain-JAX glue, emitted directly time-major.
    # TODO(synk): gather stays in XLA; an in-kernel gather (scalar-prefetch /
    # jnp.take on a VMEM table) is possible but not worth it at these sizes.
    emb_tbh = params["embedding"][token_ids.T]            # (T, B, H)
    out, h_n, c_n = _char_rnn_pallas(emb_tbh, params, h0, c0)
    return out, (h_n, c_n)


def init_params(key):
    ks = jax.random.split(key, 3 + 3 * NUM_LAYERS)
    scale = 1.0 / jnp.sqrt(HIDDEN).astype(jnp.float32)
    params = {
        "embedding": jax.random.normal(ks[0], (VOCAB, HIDDEN), jnp.float32) * 0.1,
        # Linear weights stored pre-transposed (H, O) in bf16 (MXU-native);
        # bias kept f32 as a broadcast row (1, O).
        "w_fc": jax.random.uniform(ks[1], (HIDDEN, OUTPUT), jnp.float32,
                                   -scale, scale).astype(jnp.bfloat16),
        "b_fc": jax.random.uniform(ks[2], (1, OUTPUT), jnp.float32, -scale, scale),
    }
    for l in range(NUM_LAYERS):
        k_ih, k_hh, k_b = ks[3 + 3 * l: 6 + 3 * l]
        # Pre-transposed relative to PyTorch: (in, 4H) and (H, 4H); bf16 operands.
        params[f"w_ih_{l}"] = jax.random.uniform(
            k_ih, (HIDDEN, 4 * HIDDEN), jnp.float32, -scale, scale
        ).astype(jnp.bfloat16)
        params[f"w_hh_{l}"] = jax.random.uniform(
            k_hh, (HIDDEN, 4 * HIDDEN), jnp.float32, -scale, scale
        ).astype(jnp.bfloat16)
        # Combined bias b_ih + b_hh, kept as a single f32 (1, 4H) row.
        params[f"b_{l}"] = jax.random.uniform(
            k_b, (1, 4 * HIDDEN), jnp.float32, -scale, scale)
    return params


def init_hidden(batch_size):
    z = jnp.zeros((NUM_LAYERS, batch_size, HIDDEN), jnp.float32)
    return (z, z)


if __name__ == "__main__":
    key = jax.random.PRNGKey(0)
    k_params, k_tokens = jax.random.split(key)

    params = init_params(k_params)
    token_ids = jax.random.randint(k_tokens, (BATCH, SEQ), 0, VOCAB, jnp.int32)
    hidden = init_hidden(BATCH)

    out, (h_n, c_n) = char_rnn_forward(token_ids, hidden, params)
    jax.block_until_ready((out, h_n, c_n))

    assert out.shape == (BATCH * SEQ, OUTPUT)
    assert h_n.shape == (NUM_LAYERS, BATCH, HIDDEN)
    assert c_n.shape == (NUM_LAYERS, BATCH, HIDDEN)
    assert bool(jnp.isfinite(out).all())
    print("KERNEL_OK")
</pallas_src>

<mosaic_0001>
module attributes {stable_mosaic.version = 11 : i64} {
  func.func @_char_rnn_kernel(%arg0: memref<8x8x32xf32, #tpu.memory_space<vmem>>, %arg1: memref<32x128xbf16, #tpu.memory_space<vmem>>, %arg2: memref<32x128xbf16, #tpu.memory_space<vmem>>, %arg3: memref<1x128xf32, #tpu.memory_space<vmem>>, %arg4: memref<32x128xbf16, #tpu.memory_space<vmem>>, %arg5: memref<32x128xbf16, #tpu.memory_space<vmem>>, %arg6: memref<1x128xf32, #tpu.memory_space<vmem>>, %arg7: memref<32x128xbf16, #tpu.memory_space<vmem>>, %arg8: memref<1x128xf32, #tpu.memory_space<vmem>>, %arg9: memref<2x8x32xf32, #tpu.memory_space<vmem>>, %arg10: memref<2x8x32xf32, #tpu.memory_space<vmem>>, %arg11: memref<64x128xf32, #tpu.memory_space<vmem>>, %arg12: memref<2x8x32xf32, #tpu.memory_space<vmem>>, %arg13: memref<2x8x32xf32, #tpu.memory_space<vmem>>, %arg14: memref<8x8x32xf32, #tpu.memory_space<vmem>>) attributes {dimension_semantics = [], scalar_prefetch = 0 : i64, scratch_operands = 1 : i64, tpu.core_type = #tpu.core_type<tc>} {
    %c0 = arith.constant 0 : index
    %c0_0 = arith.constant 0 : index
    %c0_1 = arith.constant 0 : index
    %0 = vector.load %arg0[%c0, %c0_0, %c0_1] : memref<8x8x32xf32, #tpu.memory_space<vmem>>, vector<8x8x32xf32>
    %1 = vector.shape_cast %0 : vector<8x8x32xf32> to vector<64x32xf32>
    %2 = arith.truncf %1 : vector<64x32xf32> to vector<64x32xbf16>
    %c0_2 = arith.constant 0 : index
    %c0_3 = arith.constant 0 : index
    %3 = vector.load %arg1[%c0_2, %c0_3] : memref<32x128xbf16, #tpu.memory_space<vmem>>, vector<32x128xbf16>
    %cst = arith.constant dense<0.000000e+00> : vector<64x128xf32>
    %4 = tpu.matmul %2, %3, %cst {dimension_numbers = #tpu.dot_dimension_numbers<[1], [0], [0], [1], [0, 0, 1, 1], [], []>} : vector<64x32xbf16>, vector<32x128xbf16>, vector<64x128xf32> -> vector<64x128xf32>
    %c0_4 = arith.constant 0 : index
    %c0_5 = arith.constant 0 : index
    %5 = vector.load %arg3[%c0_4, %c0_5] : memref<1x128xf32, #tpu.memory_space<vmem>>, vector<1x128xf32>
    %6 = vector.broadcast %5 : vector<1x128xf32> to vector<64x128xf32>
    %7 = arith.addf %4, %6 : vector<64x128xf32>
    %c0_6 = arith.constant 0 : index
    %c0_7 = arith.constant 0 : index
    %8 = vector.load %arg2[%c0_6, %c0_7] : memref<32x128xbf16, #tpu.memory_space<vmem>>, vector<32x128xbf16>
    %c0_8 = arith.constant 0 : index
    %c0_9 = arith.constant 0 : index
    %c0_10 = arith.constant 0 : index
    %9 = vector.load %arg9[%c0_8, %c0_9, %c0_10] : memref<2x8x32xf32, #tpu.memory_space<vmem>>, vector<1x8x32xf32>
    %10 = vector.shape_cast %9 : vector<1x8x32xf32> to vector<8x32xf32>
    %c0_11 = arith.constant 0 : index
    %c0_12 = arith.constant 0 : index
    %c0_13 = arith.constant 0 : index
    %11 = vector.load %arg10[%c0_11, %c0_12, %c0_13] : memref<2x8x32xf32, #tpu.memory_space<vmem>>, vector<1x8x32xf32>
    %12 = vector.shape_cast %11 : vector<1x8x32xf32> to vector<8x32xf32>
    %13 = vector.extract_strided_slice %7 {offsets = [0, 0], sizes = [8, 128], strides = [1, 1]} : vector<64x128xf32> to vector<8x128xf32>
    %14 = arith.truncf %10 : vector<8x32xf32> to vector<8x32xbf16>
    %cst_14 = arith.constant dense<0.000000e+00> : vector<8x128xf32>
    %15 = tpu.matmul %14, %8, %cst_14 {dimension_numbers = #tpu.dot_dimension_numbers<[1], [0], [0], [1], [0, 0, 1, 1], [], []>} : vector<8x32xbf16>, vector<32x128xbf16>, vector<8x128xf32> -> vector<8x128xf32>
    %16 = arith.addf %13, %15 : vector<8x128xf32>
    %17 = arith.negf %16 : vector<8x128xf32>
    %18 = math.exp %17 : vector<8x128xf32>
    %cst_15 = arith.constant 1.000000e+00 : f32
    %19 = vector.broadcast %cst_15 : f32 to vector<8x128xf32>
    %20 = arith.addf %19, %18 : vector<8x128xf32>
    %21 = arith.divf %19, %20 : vector<8x128xf32>
    %22 = math.tanh %16 : vector<8x128xf32>
    %23 = vector.extract_strided_slice %21 {offsets = [0, 0], sizes = [8, 32], strides = [1, 1]} : vector<8x128xf32> to vector<8x32xf32>
    %24 = vector.extract_strided_slice %21 {offsets = [0, 32], sizes = [8, 32], strides = [1, 1]} : vector<8x128xf32> to vector<8x32xf32>
    %25 = vector.extract_strided_slice %22 {offsets = [0, 64], sizes = [8, 32], strides = [1, 1]} : vector<8x128xf32> to vector<8x32xf32>
    %26 = vector.extract_strided_slice %21 {offsets = [0, 96], sizes = [8, 32], strides = [1, 1]} : vector<8x128xf32> to vector<8x32xf32>
    %27 = arith.mulf %24, %12 : vector<8x32xf32>
    %28 = arith.mulf %23, %25 : vector<8x32xf32>
    %29 = arith.addf %27, %28 : vector<8x32xf32>
    %30 = math.tanh %29 : vector<8x32xf32>
    %31 = arith.mulf %26, %30 : vector<8x32xf32>
    %32 = vector.extract_strided_slice %7 {offsets = [8, 0], sizes = [8, 128], strides = [1, 1]} : vector<64x128xf32> to vector<8x128xf32>
    %33 = arith.truncf %31 : vector<8x32xf32> to vector<8x32xbf16>
    %cst_16 = arith.constant dense<0.000000e+00> : vector<8x128xf32>
    %34 = tpu.matmul %33, %8, %cst_16 {dimension_numbers = #tpu.dot_dimension_numbers<[1], [0], [0], [1], [0, 0, 1, 1], [], []>} : vector<8x32xbf16>, vector<32x128xbf16>, vector<8x128xf32> -> vector<8x128xf32>
    %35 = arith.addf %32, %34 : vector<8x128xf32>
    %36 = arith.negf %35 : vector<8x128xf32>
    %37 = math.exp %36 : vector<8x128xf32>
    %cst_17 = arith.constant 1.000000e+00 : f32
    %38 = vector.broadcast %cst_17 : f32 to vector<8x128xf32>
    %39 = arith.addf %38, %37 : vector<8x128xf32>
    %40 = arith.divf %38, %39 : vector<8x128xf32>
    %41 = math.tanh %35 : vector<8x128xf32>
    %42 = vector.extract_strided_slice %40 {offsets = [0, 0], sizes = [8, 32], strides = [1, 1]} : vector<8x128xf32> to vector<8x32xf32>
    %43 = vector.extract_strided_slice %40 {offsets = [0, 32], sizes = [8, 32], strides = [1, 1]} : vector<8x128xf32> to vector<8x32xf32>
    %44 = vector.extract_strided_slice %41 {offsets = [0, 64], sizes = [8, 32], strides = [1, 1]} : vector<8x128xf32> to vector<8x32xf32>
    %45 = vector.extract_strided_slice %40 {offsets = [0, 96], sizes = [8, 32], strides = [1, 1]} : vector<8x128xf32> to vector<8x32xf32>
    %46 = arith.mulf %43, %29 : vector<8x32xf32>
    %47 = arith.mulf %42, %44 : vector<8x32xf32>
    %48 = arith.addf %46, %47 : vector<8x32xf32>
    %49 = math.tanh %48 : vector<8x32xf32>
    %50 = arith.mulf %45, %49 : vector<8x32xf32>
    %51 = vector.extract_strided_slice %7 {offsets = [16, 0], sizes = [8, 128], strides = [1, 1]} : vector<64x128xf32> to vector<8x128xf32>
    %52 = arith.truncf %50 : vector<8x32xf32> to vector<8x32xbf16>
    %cst_18 = arith.constant dense<0.000000e+00> : vector<8x128xf32>
    %53 = tpu.matmul %52, %8, %cst_18 {dimension_numbers = #tpu.dot_dimension_numbers<[1], [0], [0], [1], [0, 0, 1, 1], [], []>} : vector<8x32xbf16>, vector<32x128xbf16>, vector<8x128xf32> -> vector<8x128xf32>
    %54 = arith.addf %51, %53 : vector<8x128xf32>
    %55 = arith.negf %54 : vector<8x128xf32>
    %56 = math.exp %55 : vector<8x128xf32>
    %cst_19 = arith.constant 1.000000e+00 : f32
    %57 = vector.broadcast %cst_19 : f32 to vector<8x128xf32>
    %58 = arith.addf %57, %56 : vector<8x128xf32>
    %59 = arith.divf %57, %58 : vector<8x128xf32>
    %60 = math.tanh %54 : vector<8x128xf32>
    %61 = vector.extract_strided_slice %59 {offsets = [0, 0], sizes = [8, 32], strides = [1, 1]} : vector<8x128xf32> to vector<8x32xf32>
    %62 = vector.extract_strided_slice %59 {offsets = [0, 32], sizes = [8, 32], strides = [1, 1]} : vector<8x128xf32> to vector<8x32xf32>
    %63 = vector.extract_strided_slice %60 {offsets = [0, 64], sizes = [8, 32], strides = [1, 1]} : vector<8x128xf32> to vector<8x32xf32>
    %64 = vector.extract_strided_slice %59 {offsets = [0, 96], sizes = [8, 32], strides = [1, 1]} : vector<8x128xf32> to vector<8x32xf32>
    %65 = arith.mulf %62, %48 : vector<8x32xf32>
    %66 = arith.mulf %61, %63 : vector<8x32xf32>
    %67 = arith.addf %65, %66 : vector<8x32xf32>
    %68 = math.tanh %67 : vector<8x32xf32>
    %69 = arith.mulf %64, %68 : vector<8x32xf32>
    %70 = vector.extract_strided_slice %7 {offsets = [24, 0], sizes = [8, 128], strides = [1, 1]} : vector<64x128xf32> to vector<8x128xf32>
    %71 = arith.truncf %69 : vector<8x32xf32> to vector<8x32xbf16>
    %cst_20 = arith.constant dense<0.000000e+00> : vector<8x128xf32>
    %72 = tpu.matmul %71, %8, %cst_20 {dimension_numbers = #tpu.dot_dimension_numbers<[1], [0], [0], [1], [0, 0, 1, 1], [], []>} : vector<8x32xbf16>, vector<32x128xbf16>, vector<8x128xf32> -> vector<8x128xf32>
    %73 = arith.addf %70, %72 : vector<8x128xf32>
    %74 = arith.negf %73 : vector<8x128xf32>
    %75 = math.exp %74 : vector<8x128xf32>
    %cst_21 = arith.constant 1.000000e+00 : f32
    %76 = vector.broadcast %cst_21 : f32 to vector<8x128xf32>
    %77 = arith.addf %76, %75 : vector<8x128xf32>
    %78 = arith.divf %76, %77 : vector<8x128xf32>
    %79 = math.tanh %73 : vector<8x128xf32>
    %80 = vector.extract_strided_slice %78 {offsets = [0, 0], sizes = [8, 32], strides = [1, 1]} : vector<8x128xf32> to vector<8x32xf32>
    %81 = vector.extract_strided_slice %78 {offsets = [0, 32], sizes = [8, 32], strides = [1, 1]} : vector<8x128xf32> to vector<8x32xf32>
    %82 = vector.extract_strided_slice %79 {offsets = [0, 64], sizes = [8, 32], strides = [1, 1]} : vector<8x128xf32> to vector<8x32xf32>
    %83 = vector.extract_strided_slice %78 {offsets = [0, 96], sizes = [8, 32], strides = [1, 1]} : vector<8x128xf32> to vector<8x32xf32>
    %84 = arith.mulf %81, %67 : vector<8x32xf32>
    %85 = arith.mulf %80, %82 : vector<8x32xf32>
    %86 = arith.addf %84, %85 : vector<8x32xf32>
    %87 = math.tanh %86 : vector<8x32xf32>
    %88 = arith.mulf %83, %87 : vector<8x32xf32>
    %89 = vector.extract_strided_slice %7 {offsets = [32, 0], sizes = [8, 128], strides = [1, 1]} : vector<64x128xf32> to vector<8x128xf32>
    %90 = arith.truncf %88 : vector<8x32xf32> to vector<8x32xbf16>
    %cst_22 = arith.constant dense<0.000000e+00> : vector<8x128xf32>
    %91 = tpu.matmul %90, %8, %cst_22 {dimension_numbers = #tpu.dot_dimension_numbers<[1], [0], [0], [1], [0, 0, 1, 1], [], []>} : vector<8x32xbf16>, vector<32x128xbf16>, vector<8x128xf32> -> vector<8x128xf32>
    %92 = arith.addf %89, %91 : vector<8x128xf32>
    %93 = arith.negf %92 : vector<8x128xf32>
    %94 = math.exp %93 : vector<8x128xf32>
    %cst_23 = arith.constant 1.000000e+00 : f32
    %95 = vector.broadcast %cst_23 : f32 to vector<8x128xf32>
    %96 = arith.addf %95, %94 : vector<8x128xf32>
    %97 = arith.divf %95, %96 : vector<8x128xf32>
    %98 = math.tanh %92 : vector<8x128xf32>
    %99 = vector.extract_strided_slice %97 {offsets = [0, 0], sizes = [8, 32], strides = [1, 1]} : vector<8x128xf32> to vector<8x32xf32>
    %100 = vector.extract_strided_slice %97 {offsets = [0, 32], sizes = [8, 32], strides = [1, 1]} : vector<8x128xf32> to vector<8x32xf32>
    %101 = vector.extract_strided_slice %98 {offsets = [0, 64], sizes = [8, 32], strides = [1, 1]} : vector<8x128xf32> to vector<8x32xf32>
    %102 = vector.extract_strided_slice %97 {offsets = [0, 96], sizes = [8, 32], strides = [1, 1]} : vector<8x128xf32> to vector<8x32xf32>
    %103 = arith.mulf %100, %86 : vector<8x32xf32>
    %104 = arith.mulf %99, %101 : vector<8x32xf32>
    %105 = arith.addf %103, %104 : vector<8x32xf32>
    %106 = math.tanh %105 : vector<8x32xf32>
    %107 = arith.mulf %102, %106 : vector<8x32xf32>
    %108 = vector.extract_strided_slice %7 {offsets = [40, 0], sizes = [8, 128], strides = [1, 1]} : vector<64x128xf32> to vector<8x128xf32>
    %109 = arith.truncf %107 : vector<8x32xf32> to vector<8x32xbf16>
    %cst_24 = arith.constant dense<0.000000e+00> : vector<8x128xf32>
    %110 = tpu.matmul %109, %8, %cst_24 {dimension_numbers = #tpu.dot_dimension_numbers<[1], [0], [0], [1], [0, 0, 1, 1], [], []>} : vector<8x32xbf16>, vector<32x128xbf16>, vector<8x128xf32> -> vector<8x128xf32>
    %111 = arith.addf %108, %110 : vector<8x128xf32>
    %112 = arith.negf %111 : vector<8x128xf32>
    %113 = math.exp %112 : vector<8x128xf32>
    %cst_25 = arith.constant 1.000000e+00 : f32
    %114 = vector.broadcast %cst_25 : f32 to vector<8x128xf32>
    %115 = arith.addf %114, %113 : vector<8x128xf32>
    %116 = arith.divf %114, %115 : vector<8x128xf32>
    %117 = math.tanh %111 : vector<8x128xf32>
    %118 = vector.extract_strided_slice %116 {offsets = [0, 0], sizes = [8, 32], strides = [1, 1]} : vector<8x128xf32> to vector<8x32xf32>
    %119 = vector.extract_strided_slice %116 {offsets = [0, 32], sizes = [8, 32], strides = [1, 1]} : vector<8x128xf32> to vector<8x32xf32>
    %120 = vector.extract_strided_slice %117 {offsets = [0, 64], sizes = [8, 32], strides = [1, 1]} : vector<8x128xf32> to vector<8x32xf32>
    %121 = vector.extract_strided_slice %116 {offsets = [0, 96], sizes = [8, 32], strides = [1, 1]} : vector<8x128xf32> to vector<8x32xf32>
    %122 = arith.mulf %119, %105 : vector<8x32xf32>
    %123 = arith.mulf %118, %120 : vector<8x32xf32>
    %124 = arith.addf %122, %123 : vector<8x32xf32>
    %125 = math.tanh %124 : vector<8x32xf32>
    %126 = arith.mulf %121, %125 : vector<8x32xf32>
    %127 = vector.extract_strided_slice %7 {offsets = [48, 0], sizes = [8, 128], strides = [1, 1]} : vector<64x128xf32> to vector<8x128xf32>
    %128 = arith.truncf %126 : vector<8x32xf32> to vector<8x32xbf16>
    %cst_26 = arith.constant dense<0.000000e+00> : vector<8x128xf32>
    %129 = tpu.matmul %128, %8, %cst_26 {dimension_numbers = #tpu.dot_dimension_numbers<[1], [0], [0], [1], [0, 0, 1, 1], [], []>} : vector<8x32xbf16>, vector<32x128xbf16>, vector<8x128xf32> -> vector<8x128xf32>
    %130 = arith.addf %127, %129 : vector<8x128xf32>
    %131 = arith.negf %130 : vector<8x128xf32>
    %132 = math.exp %131 : vector<8x128xf32>
    %cst_27 = arith.constant 1.000000e+00 : f32
    %133 = vector.broadcast %cst_27 : f32 to vector<8x128xf32>
    %134 = arith.addf %133, %132 : vector<8x128xf32>
    %135 = arith.divf %133, %134 : vector<8x128xf32>
    %136 = math.tanh %130 : vector<8x128xf32>
    %137 = vector.extract_strided_slice %135 {offsets = [0, 0], sizes = [8, 32], strides = [1, 1]} : vector<8x128xf32> to vector<8x32xf32>
    %138 = vector.extract_strided_slice %135 {offsets = [0, 32], sizes = [8, 32], strides = [1, 1]} : vector<8x128xf32> to vector<8x32xf32>
    %139 = vector.extract_strided_slice %136 {offsets = [0, 64], sizes = [8, 32], strides = [1, 1]} : vector<8x128xf32> to vector<8x32xf32>
    %140 = vector.extract_strided_slice %135 {offsets = [0, 96], sizes = [8, 32], strides = [1, 1]} : vector<8x128xf32> to vector<8x32xf32>
    %141 = arith.mulf %138, %124 : vector<8x32xf32>
    %142 = arith.mulf %137, %139 : vector<8x32xf32>
    %143 = arith.addf %141, %142 : vector<8x32xf32>
    %144 = math.tanh %143 : vector<8x32xf32>
    %145 = arith.mulf %140, %144 : vector<8x32xf32>
    %146 = vector.extract_strided_slice %7 {offsets = [56, 0], sizes = [8, 128], strides = [1, 1]} : vector<64x128xf32> to vector<8x128xf32>
    %147 = arith.truncf %145 : vector<8x32xf32> to vector<8x32xbf16>
    %cst_28 = arith.constant dense<0.000000e+00> : vector<8x128xf32>
    %148 = tpu.matmul %147, %8, %cst_28 {dimension_numbers = #tpu.dot_dimension_numbers<[1], [0], [0], [1], [0, 0, 1, 1], [], []>} : vector<8x32xbf16>, vector<32x128xbf16>, vector<8x128xf32> -> vector<8x128xf32>
    %149 = arith.addf %146, %148 : vector<8x128xf32>
    %150 = arith.negf %149 : vector<8x128xf32>
    %151 = math.exp %150 : vector<8x128xf32>
    %cst_29 = arith.constant 1.000000e+00 : f32
    %152 = vector.broadcast %cst_29 : f32 to vector<8x128xf32>
    %153 = arith.addf %152, %151 : vector<8x128xf32>
    %154 = arith.divf %152, %153 : vector<8x128xf32>
    %155 = math.tanh %149 : vector<8x128xf32>
    %156 = vector.extract_strided_slice %154 {offsets = [0, 0], sizes = [8, 32], strides = [1, 1]} : vector<8x128xf32> to vector<8x32xf32>
    %157 = vector.extract_strided_slice %154 {offsets = [0, 32], sizes = [8, 32], strides = [1, 1]} : vector<8x128xf32> to vector<8x32xf32>
    %158 = vector.extract_strided_slice %155 {offsets = [0, 64], sizes = [8, 32], strides = [1, 1]} : vector<8x128xf32> to vector<8x32xf32>
    %159 = vector.extract_strided_slice %154 {offsets = [0, 96], sizes = [8, 32], strides = [1, 1]} : vector<8x128xf32> to vector<8x32xf32>
    %160 = arith.mulf %157, %143 : vector<8x32xf32>
    %161 = arith.mulf %156, %158 : vector<8x32xf32>
    %162 = arith.addf %160, %161 : vector<8x32xf32>
    %163 = math.tanh %162 : vector<8x32xf32>
    %164 = arith.mulf %159, %163 : vector<8x32xf32>
    %c0_30 = arith.constant 0 : index
    %c0_31 = arith.constant 0 : index
    %c0_32 = arith.constant 0 : index
    %165 = vector.load %arg12[%c0_30, %c0_31, %c0_32] : memref<2x8x32xf32, #tpu.memory_space<vmem>>, vector<1x8x32xf32>
    %166 = vector.shape_cast %165 : vector<1x8x32xf32> to vector<8x32xf32>
    %167 = vector.shape_cast %164 : vector<8x32xf32> to vector<1x8x32xf32>
    tpu.vector_store %arg12[%c0_30, %c0_31, %c0_32], %167 {strides = array<i32>} : memref<2x8x32xf32, #tpu.memory_space<vmem>>, vector<1x8x32xf32>,
    %c0_33 = arith.constant 0 : index
    %c0_34 = arith.constant 0 : index
    %c0_35 = arith.constant 0 : index
    %168 = vector.load %arg13[%c0_33, %c0_34, %c0_35] : memref<2x8x32xf32, #tpu.memory_space<vmem>>, vector<1x8x32xf32>
    %169 = vector.shape_cast %168 : vector<1x8x32xf32> to vector<8x32xf32>
    %170 = vector.shape_cast %162 : vector<8x32xf32> to vector<1x8x32xf32>
    tpu.vector_store %arg13[%c0_33, %c0_34, %c0_35], %170 {strides = array<i32>} : memref<2x8x32xf32, #tpu.memory_space<vmem>>, vector<1x8x32xf32>,
    %171 = tpu.concatenate %31, %50, %69, %88, %107, %126, %145, %164 in 0 : vector<8x32xf32>, vector<8x32xf32>, vector<8x32xf32>, vector<8x32xf32>, vector<8x32xf32>, vector<8x32xf32>, vector<8x32xf32>, vector<8x32xf32> -> vector<64x32xf32>
    %172 = arith.truncf %171 : vector<64x32xf32> to vector<64x32xbf16>
    %c0_36 = arith.constant 0 : index
    %c0_37 = arith.constant 0 : index
    %173 = vector.load %arg4[%c0_36, %c0_37] : memref<32x128xbf16, #tpu.memory_space<vmem>>, vector<32x128xbf16>
    %cst_38 = arith.constant dense<0.000000e+00> : vector<64x128xf32>
    %174 = tpu.matmul %172, %173, %cst_38 {dimension_numbers = #tpu.dot_dimension_numbers<[1], [0], [0], [1], [0, 0, 1, 1], [], []>} : vector<64x32xbf16>, vector<32x128xbf16>, vector<64x128xf32> -> vector<64x128xf32>
    %c0_39 = arith.constant 0 : index
    %c0_40 = arith.constant 0 : index
    %175 = vector.load %arg6[%c0_39, %c0_40] : memref<1x128xf32, #tpu.memory_space<vmem>>, vector<1x128xf32>
    %176 = vector.broadcast %175 : vector<1x128xf32> to vector<64x128xf32>
    %177 = arith.addf %174, %176 : vector<64x128xf32>
    %c0_41 = arith.constant 0 : index
    %c0_42 = arith.constant 0 : index
    %178 = vector.load %arg5[%c0_41, %c0_42] : memref<32x128xbf16, #tpu.memory_space<vmem>>, vector<32x128xbf16>
    %c1 = arith.constant 1 : index
    %c0_43 = arith.constant 0 : index
    %c0_44 = arith.constant 0 : index
    %179 = vector.load %arg9[%c1, %c0_43, %c0_44] : memref<2x8x32xf32, #tpu.memory_space<vmem>>, vector<1x8x32xf32>
    %180 = vector.shape_cast %179 : vector<1x8x32xf32> to vector<8x32xf32>
    %c1_45 = arith.constant 1 : index
    %c0_46 = arith.constant 0 : index
    %c0_47 = arith.constant 0 : index
    %181 = vector.load %arg10[%c1_45, %c0_46, %c0_47] : memref<2x8x32xf32, #tpu.memory_space<vmem>>, vector<1x8x32xf32>
    %182 = vector.shape_cast %181 : vector<1x8x32xf32> to vector<8x32xf32>
    %183 = vector.extract_strided_slice %177 {offsets = [0, 0], sizes = [8, 128], strides = [1, 1]} : vector<64x128xf32> to vector<8x128xf32>
    %184 = arith.truncf %180 : vector<8x32xf32> to vector<8x32xbf16>
    %cst_48 = arith.constant dense<0.000000e+00> : vector<8x128xf32>
    %185 = tpu.matmul %184, %178, %cst_48 {dimension_numbers = #tpu.dot_dimension_numbers<[1], [0], [0], [1], [0, 0, 1, 1], [], []>} : vector<8x32xbf16>, vector<32x128xbf16>, vector<8x128xf32> -> vector<8x128xf32>
    %186 = arith.addf %183, %185 : vector<8x128xf32>
    %187 = arith.negf %186 : vector<8x128xf32>
    %188 = math.exp %187 : vector<8x128xf32>
    %cst_49 = arith.constant 1.000000e+00 : f32
    %189 = vector.broadcast %cst_49 : f32 to vector<8x128xf32>
    %190 = arith.addf %189, %188 : vector<8x128xf32>
    %191 = arith.divf %189, %190 : vector<8x128xf32>
    %192 = math.tanh %186 : vector<8x128xf32>
    %193 = vector.extract_strided_slice %191 {offsets = [0, 0], sizes = [8, 32], strides = [1, 1]} : vector<8x128xf32> to vector<8x32xf32>
    %194 = vector.extract_strided_slice %191 {offsets = [0, 32], sizes = [8, 32], strides = [1, 1]} : vector<8x128xf32> to vector<8x32xf32>
    %195 = vector.extract_strided_slice %192 {offsets = [0, 64], sizes = [8, 32], strides = [1, 1]} : vector<8x128xf32> to vector<8x32xf32>
    %196 = vector.extract_strided_slice %191 {offsets = [0, 96], sizes = [8, 32], strides = [1, 1]} : vector<8x128xf32> to vector<8x32xf32>
    %197 = arith.mulf %194, %182 : vector<8x32xf32>
    %198 = arith.mulf %193, %195 : vector<8x32xf32>
    %199 = arith.addf %197, %198 : vector<8x32xf32>
    %200 = math.tanh %199 : vector<8x32xf32>
    %201 = arith.mulf %196, %200 : vector<8x32xf32>
    %c0_50 = arith.constant 0 : index
    %c0_51 = arith.constant 0 : index
    %c0_52 = arith.constant 0 : index
    %202 = vector.load %arg14[%c0_50, %c0_51, %c0_52] : memref<8x8x32xf32, #tpu.memory_space<vmem>>, vector<8x1x32xf32>
    %203 = vector.shape_cast %202 : vector<8x1x32xf32> to vector<8x32xf32>
    %204 = vector.shape_cast %201 : vector<8x32xf32> to vector<8x1x32xf32>
    tpu.vector_store %arg14[%c0_50, %c0_51, %c0_52], %204 {strides = array<i32>} : memref<8x8x32xf32, #tpu.memory_space<vmem>>, vector<8x1x32xf32>,
    %205 = vector.extract_strided_slice %177 {offsets = [8, 0], sizes = [8, 128], strides = [1, 1]} : vector<64x128xf32> to vector<8x128xf32>
    %206 = arith.truncf %201 : vector<8x32xf32> to vector<8x32xbf16>
    %cst_53 = arith.constant dense<0.000000e+00> : vector<8x128xf32>
    %207 = tpu.matmul %206, %178, %cst_53 {dimension_numbers = #tpu.dot_dimension_numbers<[1], [0], [0], [1], [0, 0, 1, 1], [], []>} : vector<8x32xbf16>, vector<32x128xbf16>, vector<8x128xf32> -> vector<8x128xf32>
    %208 = arith.addf %205, %207 : vector<8x128xf32>
    %209 = arith.negf %208 : vector<8x128xf32>
    %210 = math.exp %209 : vector<8x128xf32>
    %cst_54 = arith.constant 1.000000e+00 : f32
    %211 = vector.broadcast %cst_54 : f32 to vector<8x128xf32>
    %212 = arith.addf %211, %210 : vector<8x128xf32>
    %213 = arith.divf %211, %212 : vector<8x128xf32>
    %214 = math.tanh %208 : vector<8x128xf32>
    %215 = vector.extract_strided_slice %213 {offsets = [0, 0], sizes = [8, 32], strides = [1, 1]} : vector<8x128xf32> to vector<8x32xf32>
    %216 = vector.extract_strided_slice %213 {offsets = [0, 32], sizes = [8, 32], strides = [1, 1]} : vector<8x128xf32> to vector<8x32xf32>
    %217 = vector.extract_strided_slice %214 {offsets = [0, 64], sizes = [8, 32], strides = [1, 1]} : vector<8x128xf32> to vector<8x32xf32>
    %218 = vector.extract_strided_slice %213 {offsets = [0, 96], sizes = [8, 32], strides = [1, 1]} : vector<8x128xf32> to vector<8x32xf32>
    %219 = arith.mulf %216, %199 : vector<8x32xf32>
    %220 = arith.mulf %215, %217 : vector<8x32xf32>
    %221 = arith.addf %219, %220 : vector<8x32xf32>
    %222 = math.tanh %221 : vector<8x32xf32>
    %223 = arith.mulf %218, %222 : vector<8x32xf32>
    %c0_55 = arith.constant 0 : index
    %c1_56 = arith.constant 1 : index
    %c0_57 = arith.constant 0 : index
    %224 = vector.load %arg14[%c0_55, %c1_56, %c0_57] : memref<8x8x32xf32, #tpu.memory_space<vmem>>, vector<8x1x32xf32>
    %225 = vector.shape_cast %224 : vector<8x1x32xf32> to vector<8x32xf32>
    %226 = vector.shape_cast %223 : vector<8x32xf32> to vector<8x1x32xf32>
    tpu.vector_store %arg14[%c0_55, %c1_56, %c0_57], %226 {strides = array<i32>} : memref<8x8x32xf32, #tpu.memory_space<vmem>>, vector<8x1x32xf32>,
    %227 = vector.extract_strided_slice %177 {offsets = [16, 0], sizes = [8, 128], strides = [1, 1]} : vector<64x128xf32> to vector<8x128xf32>
    %228 = arith.truncf %223 : vector<8x32xf32> to vector<8x32xbf16>
    %cst_58 = arith.constant dense<0.000000e+00> : vector<8x128xf32>
    %229 = tpu.matmul %228, %178, %cst_58 {dimension_numbers = #tpu.dot_dimension_numbers<[1], [0], [0], [1], [0, 0, 1, 1], [], []>} : vector<8x32xbf16>, vector<32x128xbf16>, vector<8x128xf32> -> vector<8x128xf32>
    %230 = arith.addf %227, %229 : vector<8x128xf32>
    %231 = arith.negf %230 : vector<8x128xf32>
    %232 = math.exp %231 : vector<8x128xf32>
    %cst_59 = arith.constant 1.000000e+00 : f32
    %233 = vector.broadcast %cst_59 : f32 to vector<8x128xf32>
    %234 = arith.addf %233, %232 : vector<8x128xf32>
    %235 = arith.divf %233, %234 : vector<8x128xf32>
    %236 = math.tanh %230 : vector<8x128xf32>
    %237 = vector.extract_strided_slice %235 {offsets = [0, 0], sizes = [8, 32], strides = [1, 1]} : vector<8x128xf32> to vector<8x32xf32>
    %238 = vector.extract_strided_slice %235 {offsets = [0, 32], sizes = [8, 32], strides = [1, 1]} : vector<8x128xf32> to vector<8x32xf32>
    %239 = vector.extract_strided_slice %236 {offsets = [0, 64], sizes = [8, 32], strides = [1, 1]} : vector<8x128xf32> to vector<8x32xf32>
    %240 = vector.extract_strided_slice %235 {offsets = [0, 96], sizes = [8, 32], strides = [1, 1]} : vector<8x128xf32> to vector<8x32xf32>
    %241 = arith.mulf %238, %221 : vector<8x32xf32>
    %242 = arith.mulf %237, %239 : vector<8x32xf32>
    %243 = arith.addf %241, %242 : vector<8x32xf32>
    %244 = math.tanh %243 : vector<8x32xf32>
    %245 = arith.mulf %240, %244 : vector<8x32xf32>
    %c0_60 = arith.constant 0 : index
    %c2 = arith.constant 2 : index
    %c0_61 = arith.constant 0 : index
    %246 = vector.load %arg14[%c0_60, %c2, %c0_61] : memref<8x8x32xf32, #tpu.memory_space<vmem>>, vector<8x1x32xf32>
    %247 = vector.shape_cast %246 : vector<8x1x32xf32> to vector<8x32xf32>
    %248 = vector.shape_cast %245 : vector<8x32xf32> to vector<8x1x32xf32>
    tpu.vector_store %arg14[%c0_60, %c2, %c0_61], %248 {strides = array<i32>} : memref<8x8x32xf32, #tpu.memory_space<vmem>>, vector<8x1x32xf32>,
    %249 = vector.extract_strided_slice %177 {offsets = [24, 0], sizes = [8, 128], strides = [1, 1]} : vector<64x128xf32> to vector<8x128xf32>
    %250 = arith.truncf %245 : vector<8x32xf32> to vector<8x32xbf16>
    %cst_62 = arith.constant dense<0.000000e+00> : vector<8x128xf32>
    %251 = tpu.matmul %250, %178, %cst_62 {dimension_numbers = #tpu.dot_dimension_numbers<[1], [0], [0], [1], [0, 0, 1, 1], [], []>} : vector<8x32xbf16>, vector<32x128xbf16>, vector<8x128xf32> -> vector<8x128xf32>
    %252 = arith.addf %249, %251 : vector<8x128xf32>
    %253 = arith.negf %252 : vector<8x128xf32>
    %254 = math.exp %253 : vector<8x128xf32>
    %cst_63 = arith.constant 1.000000e+00 : f32
    %255 = vector.broadcast %cst_63 : f32 to vector<8x128xf32>
    %256 = arith.addf %255, %254 : vector<8x128xf32>
    %257 = arith.divf %255, %256 : vector<8x128xf32>
    %258 = math.tanh %252 : vector<8x128xf32>
    %259 = vector.extract_strided_slice %257 {offsets = [0, 0], sizes = [8, 32], strides = [1, 1]} : vector<8x128xf32> to vector<8x32xf32>
    %260 = vector.extract_strided_slice %257 {offsets = [0, 32], sizes = [8, 32], strides = [1, 1]} : vector<8x128xf32> to vector<8x32xf32>
    %261 = vector.extract_strided_slice %258 {offsets = [0, 64], sizes = [8, 32], strides = [1, 1]} : vector<8x128xf32> to vector<8x32xf32>
    %262 = vector.extract_strided_slice %257 {offsets = [0, 96], sizes = [8, 32], strides = [1, 1]} : vector<8x128xf32> to vector<8x32xf32>
    %263 = arith.mulf %260, %243 : vector<8x32xf32>
    %264 = arith.mulf %259, %261 : vector<8x32xf32>
    %265 = arith.addf %263, %264 : vector<8x32xf32>
    %266 = math.tanh %265 : vector<8x32xf32>
    %267 = arith.mulf %262, %266 : vector<8x32xf32>
    %c0_64 = arith.constant 0 : index
    %c3 = arith.constant 3 : index
    %c0_65 = arith.constant 0 : index
    %268 = vector.load %arg14[%c0_64, %c3, %c0_65] : memref<8x8x32xf32, #tpu.memory_space<vmem>>, vector<8x1x32xf32>
    %269 = vector.shape_cast %268 : vector<8x1x32xf32> to vector<8x32xf32>
    %270 = vector.shape_cast %267 : vector<8x32xf32> to vector<8x1x32xf32>
    tpu.vector_store %arg14[%c0_64, %c3, %c0_65], %270 {strides = array<i32>} : memref<8x8x32xf32, #tpu.memory_space<vmem>>, vector<8x1x32xf32>,
    %271 = vector.extract_strided_slice %177 {offsets = [32, 0], sizes = [8, 128], strides = [1, 1]} : vector<64x128xf32> to vector<8x128xf32>
    %272 = arith.truncf %267 : vector<8x32xf32> to vector<8x32xbf16>
    %cst_66 = arith.constant dense<0.000000e+00> : vector<8x128xf32>
    %273 = tpu.matmul %272, %178, %cst_66 {dimension_numbers = #tpu.dot_dimension_numbers<[1], [0], [0], [1], [0, 0, 1, 1], [], []>} : vector<8x32xbf16>, vector<32x128xbf16>, vector<8x128xf32> -> vector<8x128xf32>
    %274 = arith.addf %271, %273 : vector<8x128xf32>
    %275 = arith.negf %274 : vector<8x128xf32>
    %276 = math.exp %275 : vector<8x128xf32>
    %cst_67 = arith.constant 1.000000e+00 : f32
    %277 = vector.broadcast %cst_67 : f32 to vector<8x128xf32>
    %278 = arith.addf %277, %276 : vector<8x128xf32>
    %279 = arith.divf %277, %278 : vector<8x128xf32>
    %280 = math.tanh %274 : vector<8x128xf32>
    %281 = vector.extract_strided_slice %279 {offsets = [0, 0], sizes = [8, 32], strides = [1, 1]} : vector<8x128xf32> to vector<8x32xf32>
    %282 = vector.extract_strided_slice %279 {offsets = [0, 32], sizes = [8, 32], strides = [1, 1]} : vector<8x128xf32> to vector<8x32xf32>
    %283 = vector.extract_strided_slice %280 {offsets = [0, 64], sizes = [8, 32], strides = [1, 1]} : vector<8x128xf32> to vector<8x32xf32>
    %284 = vector.extract_strided_slice %279 {offsets = [0, 96], sizes = [8, 32], strides = [1, 1]} : vector<8x128xf32> to vector<8x32xf32>
    %285 = arith.mulf %282, %265 : vector<8x32xf32>
    %286 = arith.mulf %281, %283 : vector<8x32xf32>
    %287 = arith.addf %285, %286 : vector<8x32xf32>
    %288 = math.tanh %287 : vector<8x32xf32>
    %289 = arith.mulf %284, %288 : vector<8x32xf32>
    %c0_68 = arith.constant 0 : index
    %c4 = arith.constant 4 : index
    %c0_69 = arith.constant 0 : index
    %290 = vector.load %arg14[%c0_68, %c4, %c0_69] : memref<8x8x32xf32, #tpu.memory_space<vmem>>, vector<8x1x32xf32>
    %291 = vector.shape_cast %290 : vector<8x1x32xf32> to vector<8x32xf32>
    %292 = vector.shape_cast %289 : vector<8x32xf32> to vector<8x1x32xf32>
    tpu.vector_store %arg14[%c0_68, %c4, %c0_69], %292 {strides = array<i32>} : memref<8x8x32xf32, #tpu.memory_space<vmem>>, vector<8x1x32xf32>,
    %293 = vector.extract_strided_slice %177 {offsets = [40, 0], sizes = [8, 128], strides = [1, 1]} : vector<64x128xf32> to vector<8x128xf32>
    %294 = arith.truncf %289 : vector<8x32xf32> to vector<8x32xbf16>
    %cst_70 = arith.constant dense<0.000000e+00> : vector<8x128xf32>
    %295 = tpu.matmul %294, %178, %cst_70 {dimension_numbers = #tpu.dot_dimension_numbers<[1], [0], [0], [1], [0, 0, 1, 1], [], []>} : vector<8x32xbf16>, vector<32x128xbf16>, vector<8x128xf32> -> vector<8x128xf32>
    %296 = arith.addf %293, %295 : vector<8x128xf32>
    %297 = arith.negf %296 : vector<8x128xf32>
    %298 = math.exp %297 : vector<8x128xf32>
    %cst_71 = arith.constant 1.000000e+00 : f32
    %299 = vector.broadcast %cst_71 : f32 to vector<8x128xf32>
    %300 = arith.addf %299, %298 : vector<8x128xf32>
    %301 = arith.divf %299, %300 : vector<8x128xf32>
    %302 = math.tanh %296 : vector<8x128xf32>
    %303 = vector.extract_strided_slice %301 {offsets = [0, 0], sizes = [8, 32], strides = [1, 1]} : vector<8x128xf32> to vector<8x32xf32>
    %304 = vector.extract_strided_slice %301 {offsets = [0, 32], sizes = [8, 32], strides = [1, 1]} : vector<8x128xf32> to vector<8x32xf32>
    %305 = vector.extract_strided_slice %302 {offsets = [0, 64], sizes = [8, 32], strides = [1, 1]} : vector<8x128xf32> to vector<8x32xf32>
    %306 = vector.extract_strided_slice %301 {offsets = [0, 96], sizes = [8, 32], strides = [1, 1]} : vector<8x128xf32> to vector<8x32xf32>
    %307 = arith.mulf %304, %287 : vector<8x32xf32>
    %308 = arith.mulf %303, %305 : vector<8x32xf32>
    %309 = arith.addf %307, %308 : vector<8x32xf32>
    %310 = math.tanh %309 : vector<8x32xf32>
    %311 = arith.mulf %306, %310 : vector<8x32xf32>
    %c0_72 = arith.constant 0 : index
    %c5 = arith.constant 5 : index
    %c0_73 = arith.constant 0 : index
    %312 = vector.load %arg14[%c0_72, %c5, %c0_73] : memref<8x8x32xf32, #tpu.memory_space<vmem>>, vector<8x1x32xf32>
    %313 = vector.shape_cast %312 : vector<8x1x32xf32> to vector<8x32xf32>
    %314 = vector.shape_cast %311 : vector<8x32xf32> to vector<8x1x32xf32>
    tpu.vector_store %arg14[%c0_72, %c5, %c0_73], %314 {strides = array<i32>} : memref<8x8x32xf32, #tpu.memory_space<vmem>>, vector<8x1x32xf32>,
    %315 = vector.extract_strided_slice %177 {offsets = [48, 0], sizes = [8, 128], strides = [1, 1]} : vector<64x128xf32> to vector<8x128xf32>
    %316 = arith.truncf %311 : vector<8x32xf32> to vector<8x32xbf16>
    %cst_74 = arith.constant dense<0.000000e+00> : vector<8x128xf32>
    %317 = tpu.matmul %316, %178, %cst_74 {dimension_numbers = #tpu.dot_dimension_numbers<[1], [0], [0], [1], [0, 0, 1, 1], [], []>} : vector<8x32xbf16>, vector<32x128xbf16>, vector<8x128xf32> -> vector<8x128xf32>
    %318 = arith.addf %315, %317 : vector<8x128xf32>
    %319 = arith.negf %318 : vector<8x128xf32>
    %320 = math.exp %319 : vector<8x128xf32>
    %cst_75 = arith.constant 1.000000e+00 : f32
    %321 = vector.broadcast %cst_75 : f32 to vector<8x128xf32>
    %322 = arith.addf %321, %320 : vector<8x128xf32>
    %323 = arith.divf %321, %322 : vector<8x128xf32>
    %324 = math.tanh %318 : vector<8x128xf32>
    %325 = vector.extract_strided_slice %323 {offsets = [0, 0], sizes = [8, 32], strides = [1, 1]} : vector<8x128xf32> to vector<8x32xf32>
    %326 = vector.extract_strided_slice %323 {offsets = [0, 32], sizes = [8, 32], strides = [1, 1]} : vector<8x128xf32> to vector<8x32xf32>
    %327 = vector.extract_strided_slice %324 {offsets = [0, 64], sizes = [8, 32], strides = [1, 1]} : vector<8x128xf32> to vector<8x32xf32>
    %328 = vector.extract_strided_slice %323 {offsets = [0, 96], sizes = [8, 32], strides = [1, 1]} : vector<8x128xf32> to vector<8x32xf32>
    %329 = arith.mulf %326, %309 : vector<8x32xf32>
    %330 = arith.mulf %325, %327 : vector<8x32xf32>
    %331 = arith.addf %329, %330 : vector<8x32xf32>
    %332 = math.tanh %331 : vector<8x32xf32>
    %333 = arith.mulf %328, %332 : vector<8x32xf32>
    %c0_76 = arith.constant 0 : index
    %c6 = arith.constant 6 : index
    %c0_77 = arith.constant 0 : index
    %334 = vector.load %arg14[%c0_76, %c6, %c0_77] : memref<8x8x32xf32, #tpu.memory_space<vmem>>, vector<8x1x32xf32>
    %335 = vector.shape_cast %334 : vector<8x1x32xf32> to vector<8x32xf32>
    %336 = vector.shape_cast %333 : vector<8x32xf32> to vector<8x1x32xf32>
    tpu.vector_store %arg14[%c0_76, %c6, %c0_77], %336 {strides = array<i32>} : memref<8x8x32xf32, #tpu.memory_space<vmem>>, vector<8x1x32xf32>,
    %337 = vector.extract_strided_slice %177 {offsets = [56, 0], sizes = [8, 128], strides = [1, 1]} : vector<64x128xf32> to vector<8x128xf32>
    %338 = arith.truncf %333 : vector<8x32xf32> to vector<8x32xbf16>
    %cst_78 = arith.constant dense<0.000000e+00> : vector<8x128xf32>
    %339 = tpu.matmul %338, %178, %cst_78 {dimension_numbers = #tpu.dot_dimension_numbers<[1], [0], [0], [1], [0, 0, 1, 1], [], []>} : vector<8x32xbf16>, vector<32x128xbf16>, vector<8x128xf32> -> vector<8x128xf32>
    %340 = arith.addf %337, %339 : vector<8x128xf32>
    %341 = arith.negf %340 : vector<8x128xf32>
    %342 = math.exp %341 : vector<8x128xf32>
    %cst_79 = arith.constant 1.000000e+00 : f32
    %343 = vector.broadcast %cst_79 : f32 to vector<8x128xf32>
    %344 = arith.addf %343, %342 : vector<8x128xf32>
    %345 = arith.divf %343, %344 : vector<8x128xf32>
    %346 = math.tanh %340 : vector<8x128xf32>
    %347 = vector.extract_strided_slice %345 {offsets = [0, 0], sizes = [8, 32], strides = [1, 1]} : vector<8x128xf32> to vector<8x32xf32>
    %348 = vector.extract_strided_slice %345 {offsets = [0, 32], sizes = [8, 32], strides = [1, 1]} : vector<8x128xf32> to vector<8x32xf32>
    %349 = vector.extract_strided_slice %346 {offsets = [0, 64], sizes = [8, 32], strides = [1, 1]} : vector<8x128xf32> to vector<8x32xf32>
    %350 = vector.extract_strided_slice %345 {offsets = [0, 96], sizes = [8, 32], strides = [1, 1]} : vector<8x128xf32> to vector<8x32xf32>
    %351 = arith.mulf %348, %331 : vector<8x32xf32>
    %352 = arith.mulf %347, %349 : vector<8x32xf32>
    %353 = arith.addf %351, %352 : vector<8x32xf32>
    %354 = math.tanh %353 : vector<8x32xf32>
    %355 = arith.mulf %350, %354 : vector<8x32xf32>
    %c0_80 = arith.constant 0 : index
    %c7 = arith.constant 7 : index
    %c0_81 = arith.constant 0 : index
    %356 = vector.load %arg14[%c0_80, %c7, %c0_81] : memref<8x8x32xf32, #tpu.memory_space<vmem>>, vector<8x1x32xf32>
    %357 = vector.shape_cast %356 : vector<8x1x32xf32> to vector<8x32xf32>
    %358 = vector.shape_cast %355 : vector<8x32xf32> to vector<8x1x32xf32>
    tpu.vector_store %arg14[%c0_80, %c7, %c0_81], %358 {strides = array<i32>} : memref<8x8x32xf32, #tpu.memory_space<vmem>>, vector<8x1x32xf32>,
    %c1_82 = arith.constant 1 : index
    %c0_83 = arith.constant 0 : index
    %c0_84 = arith.constant 0 : index
    %359 = vector.load %arg12[%c1_82, %c0_83, %c0_84] : memref<2x8x32xf32, #tpu.memory_space<vmem>>, vector<1x8x32xf32>
    %360 = vector.shape_cast %359 : vector<1x8x32xf32> to vector<8x32xf32>
    %361 = vector.shape_cast %355 : vector<8x32xf32> to vector<1x8x32xf32>
    tpu.vector_store %arg12[%c1_82, %c0_83, %c0_84], %361 {strides = array<i32>} : memref<2x8x32xf32, #tpu.memory_space<vmem>>, vector<1x8x32xf32>,
    %c1_85 = arith.constant 1 : index
    %c0_86 = arith.constant 0 : index
    %c0_87 = arith.constant 0 : index
    %362 = vector.load %arg13[%c1_85, %c0_86, %c0_87] : memref<2x8x32xf32, #tpu.memory_space<vmem>>, vector<1x8x32xf32>
    %363 = vector.shape_cast %362 : vector<1x8x32xf32> to vector<8x32xf32>
    %364 = vector.shape_cast %353 : vector<8x32xf32> to vector<1x8x32xf32>
    tpu.vector_store %arg13[%c1_85, %c0_86, %c0_87], %364 {strides = array<i32>} : memref<2x8x32xf32, #tpu.memory_space<vmem>>, vector<1x8x32xf32>,
    %c0_88 = arith.constant 0 : index
    %c0_89 = arith.constant 0 : index
    %c0_90 = arith.constant 0 : index
    %365 = vector.load %arg14[%c0_88, %c0_89, %c0_90] : memref<8x8x32xf32, #tpu.memory_space<vmem>>, vector<8x8x32xf32>
    %366 = vector.shape_cast %365 : vector<8x8x32xf32> to vector<64x32xf32>
    %367 = arith.truncf %366 : vector<64x32xf32> to vector<64x32xbf16>
    %c0_91 = arith.constant 0 : index
    %c0_92 = arith.constant 0 : index
    %368 = vector.load %arg7[%c0_91, %c0_92] : memref<32x128xbf16, #tpu.memory_space<vmem>>, vector<32x128xbf16>
    %cst_93 = arith.constant dense<0.000000e+00> : vector<64x128xf32>
    %369 = tpu.matmul %367, %368, %cst_93 {dimension_numbers = #tpu.dot_dimension_numbers<[1], [0], [0], [1], [0, 0, 1, 1], [], []>} : vector<64x32xbf16>, vector<32x128xbf16>, vector<64x128xf32> -> vector<64x128xf32>
    %c0_94 = arith.constant 0 : index
    %c0_95 = arith.constant 0 : index
    %370 = vector.load %arg8[%c0_94, %c0_95] : memref<1x128xf32, #tpu.memory_space<vmem>>, vector<1x128xf32>
    %371 = vector.broadcast %370 : vector<1x128xf32> to vector<64x128xf32>
    %372 = arith.addf %369, %371 : vector<64x128xf32>
    %c0_96 = arith.constant 0 : index
    %c0_97 = arith.constant 0 : index
    %373 = vector.load %arg11[%c0_96, %c0_97] : memref<64x128xf32, #tpu.memory_space<vmem>>, vector<64x128xf32>
    tpu.vector_store %arg11[%c0_96, %c0_97], %372 {strides = array<i32>} : memref<64x128xf32, #tpu.memory_space<vmem>>, vector<64x128xf32>,
    return
  }
}

</mosaic_0001>

<llo_original>
// kernel: char_rnn_forward.1
$region0: #{char_rnn_forward.1}
  #allocation0 [shape = 'u32[]', space=smem, size = 0x4, offset = 0x4, fixed_abs, tag = 'smem constant byte address 0x4 - core index']
  #allocation1 [shape = 'u32[144,128]{1,0:T(1,128)}', space=vmem, size = 0x12000, scoped, tag = 'internal scratch']
  #allocation2 [shape = 'f32[8,8,32]{2,1,0:T(8,128)}', space=vmem, size = 0x8000, scoped, tag = 'scratch operand']
  %s0 = inlined_call_operand.vmem [shape: f32[8,8,32], index: 0, kind: input, shape index: {}]
  %s1 = inlined_call_operand.vmem [shape: bf16[32,128], index: 1, kind: input, shape index: {}]
  %s2 = inlined_call_operand.vmem [shape: bf16[32,128], index: 2, kind: input, shape index: {}]
  %s3 = inlined_call_operand.vmem [shape: f32[1,128], index: 3, kind: input, shape index: {}]
  %s4 = inlined_call_operand.vmem [shape: bf16[32,128], index: 4, kind: input, shape index: {}]
  %s5 = inlined_call_operand.vmem [shape: bf16[32,128], index: 5, kind: input, shape index: {}]
  %s6 = inlined_call_operand.vmem [shape: f32[1,128], index: 6, kind: input, shape index: {}]
  %s7 = inlined_call_operand.vmem [shape: bf16[32,128], index: 7, kind: input, shape index: {}]
  %s8 = inlined_call_operand.vmem [shape: f32[1,128], index: 8, kind: input, shape index: {}]
  %s9 = inlined_call_operand.vmem [shape: f32[2,8,32], index: 9, kind: input, shape index: {}]
  %s10 = inlined_call_operand.vmem [shape: f32[2,8,32], index: 10, kind: input, shape index: {}]
  %s11 = inlined_call_operand.hbm [shape: f32[64,128], index: 11, kind: output, shape index: {0}]
  %s12 = inlined_call_operand.hbm [shape: f32[2,8,32], index: 12, kind: output, shape index: {1}]
  %s13 = inlined_call_operand.hbm [shape: f32[2,8,32], index: 13, kind: output, shape index: {2}]
  %14 = xla_tuple %s11, %s12, %s13
  %s15 = sld [smem:[#allocation0]]
  $region70: #{char_rnn_forward.1} parent=0
    _
  %s17 = ssub.s32 1, %s15
  %s18 = scalar_select 0, %s17, %s15
  $region1: #{char_rnn_forward.1} parent=0
    #allocation3 [shape = 'u8[32768]{0}', space=vmem, size = 0x8000, scoped, tag = 'output window, operand 0, single buffered']
    #allocation4 [shape = 's32[1]{0}', space=sflag, size = 0x4, scoped, tag = 'scoped memory for char_rnn_forward.1']
    #allocation5 [shape = 'u8[8192]{0}', space=vmem, size = 0x2000, scoped, tag = 'output window, operand 1, single buffered']
    #allocation6 [shape = 's32[1]{0}', space=sflag, size = 0x4, scoped, tag = 'scoped memory for char_rnn_forward.1']
    #allocation7 [shape = 'u8[8192]{0}', space=vmem, size = 0x2000, scoped, tag = 'output window, operand 2, single buffered']
    %19 = vsyncpa [#allocation4], 0
    %20 = vsyncpa [#allocation6], 0
    // Predicated region
    $region2: #{char_rnn_forward.1} parent=1 // pred_check
      _
    $region3: #{char_rnn_forward.1} parent=1 // pred_check_branch
      %22 = sbr.rel (0) target = $region5
    $region4: #{char_rnn_forward.1} parent=1 // pred_region
      _
    $region5: #{char_rnn_forward.1} parent=1 // pred_fallthru
      _
    // Predicated region
    $region6: #{char_rnn_forward.1} parent=1 // pred_check
      _
    $region7: #{char_rnn_forward.1} parent=1 // pred_check_branch
      %24 = sbr.rel (0) target = $region9
    $region8: #{char_rnn_forward.1} parent=1 // pred_region
      _
    $region9: #{char_rnn_forward.1} parent=1 // pred_fallthru
      _
    // Predicated region
    $region10: #{char_rnn_forward.1} parent=1 // pred_check
      _
    $region11: #{char_rnn_forward.1} parent=1 // pred_check_branch
      %26 = sbr.rel (0) target = $region13
    $region12: #{char_rnn_forward.1} parent=1 // pred_region
      _
    $region13: #{char_rnn_forward.1} parent=1 // pred_fallthru
      _
    // Predicated region
    $region14: #{char_rnn_forward.1} parent=1 // pred_check
      _
    $region15: #{char_rnn_forward.1} parent=1 // pred_check_branch
      %28 = sbr.rel (0) target = $region17
    $region16: #{char_rnn_forward.1} parent=1 // pred_region
      _
    $region17: #{char_rnn_forward.1} parent=1 // pred_fallthru
      _
    // Predicated region
    $region18: #{char_rnn_forward.1} parent=1 // pred_check
      _
    $region19: #{char_rnn_forward.1} parent=1 // pred_check_branch
      %30 = sbr.rel (0) target = $region21
    $region20: #{char_rnn_forward.1} parent=1 // pred_region
      _
    $region21: #{char_rnn_forward.1} parent=1 // pred_fallthru
      _
    // Predicated region
    $region22: #{char_rnn_forward.1} parent=1 // pred_check
      _
    $region23: #{char_rnn_forward.1} parent=1 // pred_check_branch
      %32 = sbr.rel (0) target = $region25
    $region24: #{char_rnn_forward.1} parent=1 // pred_region
      _
    $region25: #{char_rnn_forward.1} parent=1 // pred_fallthru
      _
    // Predicated region
    $region26: #{char_rnn_forward.1} parent=1 // pred_check
      _
    $region27: #{char_rnn_forward.1} parent=1 // pred_check_branch
      %34 = sbr.rel (0) target = $region29
    $region28: #{char_rnn_forward.1} parent=1 // pred_region
      _
    $region29: #{char_rnn_forward.1} parent=1 // pred_fallthru
      _
    // Predicated region
    $region30: #{char_rnn_forward.1} parent=1 // pred_check
      _
    $region31: #{char_rnn_forward.1} parent=1 // pred_check_branch
      %36 = sbr.rel (0) target = $region33
    $region32: #{char_rnn_forward.1} parent=1 // pred_region
      _
    $region33: #{char_rnn_forward.1} parent=1 // pred_fallthru
      _
    // Predicated region
    $region34: #{char_rnn_forward.1} parent=1 // pred_check
      _
    $region35: #{char_rnn_forward.1} parent=1 // pred_check_branch
      %38 = sbr.rel (0) target = $region37
    $region36: #{char_rnn_forward.1} parent=1 // pred_region
      _
    $region37: #{char_rnn_forward.1} parent=1 // pred_fallthru
      _
    // Predicated region
    $region38: #{char_rnn_forward.1} parent=1 // pred_check
      _
    $region39: #{char_rnn_forward.1} parent=1 // pred_check_branch
      %40 = sbr.rel (0) target = $region41
    $region40: #{char_rnn_forward.1} parent=1 // pred_region
      _
    $region41: #{char_rnn_forward.1} parent=1 // pred_fallthru
      _
    // Predicated region
    $region42: #{char_rnn_forward.1} parent=1 // pred_check
      _
    $region43: #{char_rnn_forward.1} parent=1 // pred_check_branch
      %42 = sbr.rel (0) target = $region45
    $region44: #{char_rnn_forward.1} parent=1 // pred_region
      _
    $region45: #{char_rnn_forward.1} parent=1 // pred_fallthru
      _
    %v44 = vld [vmem:[%s0] sm:$0xff]
    %v45 = vld [vmem:[%s0 + $0x8] sm:$0xff]
    %v46 = vld [vmem:[%s0 + $0x10] sm:$0xff]
    %v47 = vld [vmem:[%s0 + $0x18] sm:$0xff]
    %v48 = vld [vmem:[%s0 + $0x20] sm:$0xff]
    %v49 = vld [vmem:[%s0 + $0x28] sm:$0xff]
    %v50 = vld [vmem:[%s0 + $0x30] sm:$0xff]
    %v51 = vld [vmem:[%s0 + $0x38] sm:$0xff]
    %v52 = vpack.c.bf16 %v45, %v44
    %v53 = vpack.c.bf16 %v47, %v46
    %v54 = vpack.c.bf16 %v49, %v48
    %v55 = vpack.c.bf16 %v51, %v50
    %v56 = vld [vmem:[%s1] sm:$0xf]
    %v57 = vld [vmem:[%s1 + $0x4] sm:$0xf]
    %v58 = vld [vmem:[%s1 + $0x8] sm:$0xf]
    %v59 = vld [vmem:[%s1 + $0xc] sm:$0xf]
    %v60 = vld [vmem:[%s3] sm:$0x1]
    %v62 = vlaneseq
    %v63 = vshrl.u32 %v62, 7
    %v64 = vsub.s32 0, %v63
    %v65 = vrot.slane %v60, %v64
    %v71 = vunpack.c.l.b16 %v56
    %v72 = vunpack.c.l.b16 %v57
    %v73 = vunpack.c.l.b16 %v58
    %v74 = vunpack.c.l.b16 %v59
    %v75 = vpack.c.b16 %v72, %v71
    %v76 = vpack.c.b16 %v74, %v73
    %vm79 = vcmask 261120
    %v81 = vsel %vm79, %v52, 0
    %v84 = vsel %vm79, %v53, 0
    %v87 = vsel %vm79, %v54, 0
    %v90 = vsel %vm79, %v55, 0
    %92 = vmatprep.subr.bf16.mxu0 0
    %93 = vmatpush1.bf16.msra.mxu0 %v75
    %94 = vmatprep.subr.bf16.mxu0 0
    %95 = vmatpush1.bf16.msra.mxu0 %v76
    %96 = vmatprep.subr.bf16.mxu0 0
    %97 = vmatpush1.bf16.msra.mxu0 0
    %98 = vmatprep.subr.bf16.mxu0 0
    %99 = vmatpush1.bf16.msra.mxu0 0
    %100 = vmatprep.subr.bf16.mxu0 0
    %101 = vmatpush1.bf16.msra.mxu0 0
    %102 = vmatprep.subr.bf16.mxu0 0
    %103 = vmatpush1.bf16.msra.mxu0 0
    %104 = vmatprep.subr.bf16.mxu0 0
    %105 = vmatpush1.bf16.msra.mxu0 0
    %106 = vmatprep.subr.bf16.mxu0 0
    %107 = vmatpush1.bf16.msra.mxu0 0
    %108 = vmatprep.subr.bf16.mxu0 0
    %109 = vmatpush1.bf16.msra.mxu0 0
    %110 = vmatprep.subr.bf16.mxu0 0
    %111 = vmatpush1.bf16.msra.mxu0 0
    %112 = vmatprep.subr.bf16.mxu0 0
    %113 = vmatpush1.bf16.msra.mxu0 0
    %114 = vmatprep.subr.bf16.mxu0 0
    %115 = vmatpush1.bf16.msra.mxu0 0
    %116 = vmatprep.subr.bf16.mxu0 0
    %117 = vmatpush1.bf16.msra.mxu0 0
    %118 = vmatprep.subr.bf16.mxu0 0
    %119 = vmatpush1.bf16.msra.mxu0 0
    %120 = vmatprep.subr.bf16.mxu0 0
    %121 = vmatpush1.bf16.msra.mxu0 0
    %122 = vmatprep.subr.bf16.mxu0 0
    %123 = vmatpush1.bf16.msra.mxu0 0
    %124 = vmatprep.mubr.bf16.mxu0 0
    %125 = vmatmul.mubr.bf16.gmra.mrb[0].mxu0 %v81
    %v126 = vpop.f32.mrb[0].mxu0
    %v127 = vadd.f32 %v65, %v126
    %v128 = vpop.f32.mrb[0].mxu0
    %v129 = vpop.f32.mrb[0].mxu0
    %v130 = vadd.f32 %v65, %v129
    %v131 = vpop.f32.mrb[0].mxu0
    %132 = vmatprep.mubr.bf16.mxu0 0
    %133 = vmatmul.mubr.bf16.gmra.mrb[0].mxu0 %v84
    %v134 = vpop.f32.mrb[0].mxu0
    %v135 = vadd.f32 %v65, %v134
    %v136 = vpop.f32.mrb[0].mxu0
    %v137 = vpop.f32.mrb[0].mxu0
    %v138 = vadd.f32 %v65, %v137
    %v139 = vpop.f32.mrb[0].mxu0
    %140 = vmatprep.mubr.bf16.mxu0 0
    %141 = vmatmul.mubr.bf16.gmra.mrb[0].mxu0 %v87
    %v142 = vpop.f32.mrb[0].mxu0
    %v143 = vadd.f32 %v65, %v142
    %v144 = vpop.f32.mrb[0].mxu0
    %v145 = vpop.f32.mrb[0].mxu0
    %v146 = vadd.f32 %v65, %v145
    %v147 = vpop.f32.mrb[0].mxu0
    %148 = vmatprep.mubr.bf16.mxu0 0
    %149 = vmatmul.mubr.bf16.gmra.mrb[0].mxu0 %v90
    %v150 = vpop.f32.mrb[0].mxu0
    %v151 = vadd.f32 %v65, %v150
    %v152 = vpop.f32.mrb[0].mxu0
    %v153 = vpop.f32.mrb[0].mxu0
    %v154 = vadd.f32 %v65, %v153
    %v155 = vpop.f32.mrb[0].mxu0
    %156 = vdwg.mxu0
    %v157 = vld [vmem:[%s2] sm:$0xf]
    %v158 = vld [vmem:[%s2 + $0x4] sm:$0xf]
    %v159 = vld [vmem:[%s2 + $0x8] sm:$0xf]
    %v160 = vld [vmem:[%s2 + $0xc] sm:$0xf]
    %v161 = vld [vmem:[%s9] sm:$0xff]
    %v162 = vld [vmem:[%s10] sm:$0xff]
    %v163 = vpack.c.bf16 %v161, %v161
    %v168 = vunpack.c.l.b16 %v157
    %v169 = vunpack.c.l.b16 %v158
    %v170 = vunpack.c.l.b16 %v159
    %v171 = vunpack.c.l.b16 %v160
    %v172 = vpack.c.b16 %v169, %v168
    %v173 = vpack.c.b16 %v171, %v170
    %v177 = vsel %vm79, %v163, 0
    %179 = vmatprep.subr.bf16.mxu0 0
    %180 = vmatpush1.bf16.msra.mxu0 %v172
    %181 = vmatprep.subr.bf16.mxu0 0
    %182 = vmatpush1.bf16.msra.mxu0 %v173
    %183 = vmatprep.subr.bf16.mxu0 0
    %184 = vmatpush1.bf16.msra.mxu0 0
    %185 = vmatprep.subr.bf16.mxu0 0
    %186 = vmatpush1.bf16.msra.mxu0 0
    %187 = vmatprep.subr.bf16.mxu0 0
    %188 = vmatpush1.bf16.msra.mxu0 0
    %189 = vmatprep.subr.bf16.mxu0 0
    %190 = vmatpush1.bf16.msra.mxu0 0
    %191 = vmatprep.subr.bf16.mxu0 0
    %192 = vmatpush1.bf16.msra.mxu0 0
    %193 = vmatprep.subr.bf16.mxu0 0
    %194 = vmatpush1.bf16.msra.mxu0 0
    %195 = vmatprep.subr.bf16.mxu0 0
    %196 = vmatpush1.bf16.msra.mxu0 0
    %197 = vmatprep.subr.bf16.mxu0 0
    %198 = vmatpush1.bf16.msra.mxu0 0
    %199 = vmatprep.subr.bf16.mxu0 0
    %200 = vmatpush1.bf16.msra.mxu0 0
    %201 = vmatprep.subr.bf16.mxu0 0
    %202 = vmatpush1.bf16.msra.mxu0 0
    %203 = vmatprep.subr.bf16.mxu0 0
    %204 = vmatpush1.bf16.msra.mxu0 0
    %205 = vmatprep.subr.bf16.mxu0 0
    %206 = vmatpush1.bf16.msra.mxu0 0
    %207 = vmatprep.subr.bf16.mxu0 0
    %208 = vmatpush1.bf16.msra.mxu0 0
    %209 = vmatprep.subr.bf16.mxu0 0
    %210 = vmatpush1.bf16.msra.mxu0 0
    %211 = vmatprep.mubr.bf16.mxu0 0
    %212 = vmatmul.mubr.bf16.gmra.mrb[0].mxu0 %v177
    %v213 = vpop.f32.mrb[0].mxu0
    %v214 = vadd.f32 0.0, %v213
    %v215 = vpop.f32.mrb[0].mxu0
    %v216 = vpop.f32.mrb[0].mxu0
    %v217 = vpop.f32.mrb[0].mxu0
    %218 = vdwg.mxu0
    %v219 = vadd.f32 %v127, %v214
    %v220 = vxor.u32 %v219, 2147483648
    %v221 = vmul.f32 %v220, 1.442695
    %v222 = vpow.pop %v221
    %v223 = vadd.f32 %v222, 1.0
    %v224 = vrcp.pop %v223
    %v225 = vmul.f32 1.0, %v224
    %v226 = vtanh.pop %v219
    %228 = vrot.lane.b32.xlu0 %v162, 32
    %v229 = vpop.permute.xlu0 %228
    %v231 = vmul.f32 %v225, %v229
    %233 = vrot.lane.b32.xlu0 %v226, 64
    %v234 = vpop.permute.xlu0 %233
    %v236 = vmul.f32 %v225, %v234
    %238 = vrot.lane.b32.xlu0 %v236, 32
    %v239 = vpop.permute.xlu0 %238
    %v241 = vadd.f32 %v231, %v239
    %v242 = vtanh.pop %v241
    %244 = vrot.lane.b32.xlu0 %v242, 64
    %v245 = vpop.permute.xlu0 %244
    %v247 = vmul.f32 %v225, %v245
    %v248 = vpack.c.bf16 %v247, %v247
    %250 = vrot.lane.b32.xlu0 %v248, 32
    %v251 = vpop.permute.xlu0 %250
    %v253 = vsel %vm79, %v251, 0
    %255 = vmatprep.subr.bf16.mxu0 0
    %256 = vmatpush1.bf16.msra.mxu0 %v172
    %257 = vmatprep.subr.bf16.mxu0 0
    %258 = vmatpush1.bf16.msra.mxu0 %v173
    %259 = vmatprep.subr.bf16.mxu0 0
    %260 = vmatpush1.bf16.msra.mxu0 0
    %261 = vmatprep.subr.bf16.mxu0 0
    %262 = vmatpush1.bf16.msra.mxu0 0
    %263 = vmatprep.subr.bf16.mxu0 0
    %264 = vmatpush1.bf16.msra.mxu0 0
    %265 = vmatprep.subr.bf16.mxu0 0
    %266 = vmatpush1.bf16.msra.mxu0 0
    %267 = vmatprep.subr.bf16.mxu0 0
    %268 = vmatpush1.bf16.msra.mxu0 0
    %269 = vmatprep.subr.bf16.mxu0 0
    %270 = vmatpush1.bf16.msra.mxu0 0
    %271 = vmatprep.subr.bf16.mxu0 0
    %272 = vmatpush1.bf16.msra.mxu0 0
    %273 = vmatprep.subr.bf16.mxu0 0
    %274 = vmatpush1.bf16.msra.mxu0 0
    %275 = vmatprep.subr.bf16.mxu0 0
    %276 = vmatpush1.bf16.msra.mxu0 0
    %277 = vmatprep.subr.bf16.mxu0 0
    %278 = vmatpush1.bf16.msra.mxu0 0
    %279 = vmatprep.subr.bf16.mxu0 0
    %280 = vmatpush1.bf16.msra.mxu0 0
    %281 = vmatprep.subr.bf16.mxu0 0
    %282 = vmatpush1.bf16.msra.mxu0 0
    %283 = vmatprep.subr.bf16.mxu0 0
    %284 = vmatpush1.bf16.msra.mxu0 0
    %285 = vmatprep.subr.bf16.mxu0 0
    %286 = vmatpush1.bf16.msra.mxu0 0
    %287 = vmatprep.mubr.bf16.mxu0 0
    %288 = vmatmul.mubr.bf16.gmra.mrb[0].mxu0 %v253
    %v289 = vpop.f32.mrb[0].mxu0
    %v290 = vadd.f32 0.0, %v289
    %v291 = vpop.f32.mrb[0].mxu0
    %v292 = vpop.f32.mrb[0].mxu0
    %v293 = vpop.f32.mrb[0].mxu0
    %294 = vdwg.mxu0
    %v295 = vadd.f32 %v130, %v290
    %v296 = vxor.u32 %v295, 2147483648
    %v297 = vmul.f32 %v296, 1.442695
    %v298 = vpow.pop %v297
    %v299 = vadd.f32 %v298, 1.0
    %v300 = vrcp.pop %v299
    %v301 = vmul.f32 1.0, %v300
    %v302 = vtanh.pop %v295
    %v303 = vmul.f32 %v301, %v241
    %305 = vrot.lane.b32.xlu0 %v302, 64
    %v306 = vpop.permute.xlu0 %305
    %v308 = vmul.f32 %v301, %v306
    %310 = vrot.lane.b32.xlu0 %v308, 32
    %v311 = vpop.permute.xlu0 %310
    %v313 = vadd.f32 %v303, %v311
    %v314 = vtanh.pop %v313
    %316 = vrot.lane.b32.xlu0 %v314, 64
    %v317 = vpop.permute.xlu0 %316
    %v319 = vmul.f32 %v301, %v317
    %v320 = vpack.c.bf16 %v319, %v319
    %322 = vrot.lane.b32.xlu0 %v320, 32
    %v323 = vpop.permute.xlu0 %322
    %v325 = vsel %vm79, %v323, 0
    %327 = vmatprep.subr.bf16.mxu0 0
    %328 = vmatpush1.bf16.msra.mxu0 %v172
    %329 = vmatprep.subr.bf16.mxu0 0
    %330 = vmatpush1.bf16.msra.mxu0 %v173
    %331 = vmatprep.subr.bf16.mxu0 0
    %332 = vmatpush1.bf16.msra.mxu0 0
    %333 = vmatprep.subr.bf16.mxu0 0
    %334 = vmatpush1.bf16.msra.mxu0 0
    %335 = vmatprep.subr.bf16.mxu0 0
    %336 = vmatpush1.bf16.msra.mxu0 0
    %337 = vmatprep.subr.bf16.mxu0 0
    %338 = vmatpush1.bf16.msra.mxu0 0
    %339 = vmatprep.subr.bf16.mxu0 0
    %340 = vmatpush1.bf16.msra.mxu0 0
    %341 = vmatprep.subr.bf16.mxu0 0
    %342 = vmatpush1.bf16.msra.mxu0 0
    %343 = vmatprep.subr.bf16.mxu0 0
    %344 = vmatpush1.bf16.msra.mxu0 0
    %345 = vmatprep.subr.bf16.mxu0 0
    %346 = vmatpush1.bf16.msra.mxu0 0
    %347 = vmatprep.subr.bf16.mxu0 0
    %348 = vmatpush1.bf16.msra.mxu0 0
    %349 = vmatprep.subr.bf16.mxu0 0
    %350 = vmatpush1.bf16.msra.mxu0 0
    %351 = vmatprep.subr.bf16.mxu0 0
    %352 = vmatpush1.bf16.msra.mxu0 0
    %353 = vmatprep.subr.bf16.mxu0 0
    %354 = vmatpush1.bf16.msra.mxu0 0
    %355 = vmatprep.subr.bf16.mxu0 0
    %356 = vmatpush1.bf16.msra.mxu0 0
    %357 = vmatprep.subr.bf16.mxu0 0
    %358 = vmatpush1.bf16.msra.mxu0 0
    %359 = vmatprep.mubr.bf16.mxu0 0
    %360 = vmatmul.mubr.bf16.gmra.mrb[0].mxu0 %v325
    %v361 = vpop.f32.mrb[0].mxu0
    %v362 = vadd.f32 0.0, %v361
    %v363 = vpop.f32.mrb[0].mxu0
    %v364 = vpop.f32.mrb[0].mxu0
    %v365 = vpop.f32.mrb[0].mxu0
    %366 = vdwg.mxu0
    %v367 = vadd.f32 %v135, %v362
    %v368 = vxor.u32 %v367, 2147483648
    %v369 = vmul.f32 %v368, 1.442695
    %v370 = vpow.pop %v369
    %v371 = vadd.f32 %v370, 1.0
    %v372 = vrcp.pop %v371
    %v373 = vmul.f32 1.0, %v372
    %v374 = vtanh.pop %v367
    %v375 = vmul.f32 %v373, %v313
    %377 = vrot.lane.b32.xlu0 %v374, 64
    %v378 = vpop.permute.xlu0 %377
    %v380 = vmul.f32 %v373, %v378
    %382 = vrot.lane.b32.xlu0 %v380, 32
    %v383 = vpop.permute.xlu0 %382
    %v385 = vadd.f32 %v375, %v383
    %v386 = vtanh.pop %v385
    %388 = vrot.lane.b32.xlu0 %v386, 64
    %v389 = vpop.permute.xlu0 %388
    %v391 = vmul.f32 %v373, %v389
    %v392 = vpack.c.bf16 %v391, %v391
    %394 = vrot.lane.b32.xlu0 %v392, 32
    %v395 = vpop.permute.xlu0 %394
    %v397 = vsel %vm79, %v395, 0
    %399 = vmatprep.subr.bf16.mxu0 0
    %400 = vmatpush1.bf16.msra.mxu0 %v172
    %401 = vmatprep.subr.bf16.mxu0 0
    %402 = vmatpush1.bf16.msra.mxu0 %v173
    %403 = vmatprep.subr.bf16.mxu0 0
    %404 = vmatpush1.bf16.msra.mxu0 0
    %405 = vmatprep.subr.bf16.mxu0 0
    %406 = vmatpush1.bf16.msra.mxu0 0
    %407 = vmatprep.subr.bf16.mxu0 0
    %408 = vmatpush1.bf16.msra.mxu0 0
    %409 = vmatprep.subr.bf16.mxu0 0
    %410 = vmatpush1.bf16.msra.mxu0 0
    %411 = vmatprep.subr.bf16.mxu0 0
    %412 = vmatpush1.bf16.msra.mxu0 0
    %413 = vmatprep.subr.bf16.mxu0 0
    %414 = vmatpush1.bf16.msra.mxu0 0
    %415 = vmatprep.subr.bf16.mxu0 0
    %416 = vmatpush1.bf16.msra.mxu0 0
    %417 = vmatprep.subr.bf16.mxu0 0
    %418 = vmatpush1.bf16.msra.mxu0 0
    %419 = vmatprep.subr.bf16.mxu0 0
    %420 = vmatpush1.bf16.msra.mxu0 0
    %421 = vmatprep.subr.bf16.mxu0 0
    %422 = vmatpush1.bf16.msra.mxu0 0
    %423 = vmatprep.subr.bf16.mxu0 0
    %424 = vmatpush1.bf16.msra.mxu0 0
    %425 = vmatprep.subr.bf16.mxu0 0
    %426 = vmatpush1.bf16.msra.mxu0 0
    %427 = vmatprep.subr.bf16.mxu0 0
    %428 = vmatpush1.bf16.msra.mxu0 0
    %429 = vmatprep.subr.bf16.mxu0 0
    %430 = vmatpush1.bf16.msra.mxu0 0
    %431 = vmatprep.mubr.bf16.mxu0 0
    %432 = vmatmul.mubr.bf16.gmra.mrb[0].mxu0 %v397
    %v433 = vpop.f32.mrb[0].mxu0
    %v434 = vadd.f32 0.0, %v433
    %v435 = vpop.f32.mrb[0].mxu0
    %v436 = vpop.f32.mrb[0].mxu0
    %v437 = vpop.f32.mrb[0].mxu0
    %438 = vdwg.mxu0
    %v439 = vadd.f32 %v138, %v434
    %v440 = vxor.u32 %v439, 2147483648
    %v441 = vmul.f32 %v440, 1.442695
    %v442 = vpow.pop %v441
    %v443 = vadd.f32 %v442, 1.0
    %v444 = vrcp.pop %v443
    %v445 = vmul.f32 1.0, %v444
    %v446 = vtanh.pop %v439
    %v447 = vmul.f32 %v445, %v385
    %449 = vrot.lane.b32.xlu0 %v446, 64
    %v450 = vpop.permute.xlu0 %449
    %v452 = vmul.f32 %v445, %v450
    %454 = vrot.lane.b32.xlu0 %v452, 32
    %v455 = vpop.permute.xlu0 %454
    %v457 = vadd.f32 %v447, %v455
    %v458 = vtanh.pop %v457
    %460 = vrot.lane.b32.xlu0 %v458, 64
    %v461 = vpop.permute.xlu0 %460
    %v463 = vmul.f32 %v445, %v461
    %v464 = vpack.c.bf16 %v463, %v463
    %466 = vrot.lane.b32.xlu0 %v464, 32
    %v467 = vpop.permute.xlu0 %466
    %v469 = vsel %vm79, %v467, 0
    %471 = vmatprep.subr.bf16.mxu0 0
    %472 = vmatpush1.bf16.msra.mxu0 %v172
    %473 = vmatprep.subr.bf16.mxu0 0
    %474 = vmatpush1.bf16.msra.mxu0 %v173
    %475 = vmatprep.subr.bf16.mxu0 0
    %476 = vmatpush1.bf16.msra.mxu0 0
    %477 = vmatprep.subr.bf16.mxu0 0
    %478 = vmatpush1.bf16.msra.mxu0 0
    %479 = vmatprep.subr.bf16.mxu0 0
    %480 = vmatpush1.bf16.msra.mxu0 0
    %481 = vmatprep.subr.bf16.mxu0 0
    %482 = vmatpush1.bf16.msra.mxu0 0
    %483 = vmatprep.subr.bf16.mxu0 0
    %484 = vmatpush1.bf16.msra.mxu0 0
    %485 = vmatprep.subr.bf16.mxu0 0
    %486 = vmatpush1.bf16.msra.mxu0 0
    %487 = vmatprep.subr.bf16.mxu0 0
    %488 = vmatpush1.bf16.msra.mxu0 0
    %489 = vmatprep.subr.bf16.mxu0 0
    %490 = vmatpush1.bf16.msra.mxu0 0
    %491 = vmatprep.subr.bf16.mxu0 0
    %492 = vmatpush1.bf16.msra.mxu0 0
    %493 = vmatprep.subr.bf16.mxu0 0
    %494 = vmatpush1.bf16.msra.mxu0 0
    %495 = vmatprep.subr.bf16.mxu0 0
    %496 = vmatpush1.bf16.msra.mxu0 0
    %497 = vmatprep.subr.bf16.mxu0 0
    %498 = vmatpush1.bf16.msra.mxu0 0
    %499 = vmatprep.subr.bf16.mxu0 0
    %500 = vmatpush1.bf16.msra.mxu0 0
    %501 = vmatprep.subr.bf16.mxu0 0
    %502 = vmatpush1.bf16.msra.mxu0 0
    %503 = vmatprep.mubr.bf16.mxu0 0
    %504 = vmatmul.mubr.bf16.gmra.mrb[0].mxu0 %v469
    %v505 = vpop.f32.mrb[0].mxu0
    %v506 = vadd.f32 0.0, %v505
    %v507 = vpop.f32.mrb[0].mxu0
    %v508 = vpop.f32.mrb[0].mxu0
    %v509 = vpop.f32.mrb[0].mxu0
    %510 = vdwg.mxu0
    %v511 = vadd.f32 %v143, %v506
    %v512 = vxor.u32 %v511, 2147483648
    %v513 = vmul.f32 %v512, 1.442695
    %v514 = vpow.pop %v513
    %v515 = vadd.f32 %v514, 1.0
    %v516 = vrcp.pop %v515
    %v517 = vmul.f32 1.0, %v516
    %v518 = vtanh.pop %v511
    %v519 = vmul.f32 %v517, %v457
    %521 = vrot.lane.b32.xlu0 %v518, 64
    %v522 = vpop.permute.xlu0 %521
    %v524 = vmul.f32 %v517, %v522
    %526 = vrot.lane.b32.xlu0 %v524, 32
    %v527 = vpop.permute.xlu0 %526
    %v529 = vadd.f32 %v519, %v527
    %v530 = vtanh.pop %v529
    %532 = vrot.lane.b32.xlu0 %v530, 64
    %v533 = vpop.permute.xlu0 %532
    %v535 = vmul.f32 %v517, %v533
    %v536 = vpack.c.bf16 %v535, %v535
    %538 = vrot.lane.b32.xlu0 %v536, 32
    %v539 = vpop.permute.xlu0 %538
    %v541 = vsel %vm79, %v539, 0
    %543 = vmatprep.subr.bf16.mxu0 0
    %544 = vmatpush1.bf16.msra.mxu0 %v172
    %545 = vmatprep.subr.bf16.mxu0 0
    %546 = vmatpush1.bf16.msra.mxu0 %v173
    %547 = vmatprep.subr.bf16.mxu0 0
    %548 = vmatpush1.bf16.msra.mxu0 0
    %549 = vmatprep.subr.bf16.mxu0 0
    %550 = vmatpush1.bf16.msra.mxu0 0
    %551 = vmatprep.subr.bf16.mxu0 0
    %552 = vmatpush1.bf16.msra.mxu0 0
    %553 = vmatprep.subr.bf16.mxu0 0
    %554 = vmatpush1.bf16.msra.mxu0 0
    %555 = vmatprep.subr.bf16.mxu0 0
    %556 = vmatpush1.bf16.msra.mxu0 0
    %557 = vmatprep.subr.bf16.mxu0 0
    %558 = vmatpush1.bf16.msra.mxu0 0
    %559 = vmatprep.subr.bf16.mxu0 0
    %560 = vmatpush1.bf16.msra.mxu0 0
    %561 = vmatprep.subr.bf16.mxu0 0
    %562 = vmatpush1.bf16.msra.mxu0 0
    %563 = vmatprep.subr.bf16.mxu0 0
    %564 = vmatpush1.bf16.msra.mxu0 0
    %565 = vmatprep.subr.bf16.mxu0 0
    %566 = vmatpush1.bf16.msra.mxu0 0
    %567 = vmatprep.subr.bf16.mxu0 0
    %568 = vmatpush1.bf16.msra.mxu0 0
    %569 = vmatprep.subr.bf16.mxu0 0
    %570 = vmatpush1.bf16.msra.mxu0 0
    %571 = vmatprep.subr.bf16.mxu0 0
    %572 = vmatpush1.bf16.msra.mxu0 0
    %573 = vmatprep.subr.bf16.mxu0 0
    %574 = vmatpush1.bf16.msra.mxu0 0
    %575 = vmatprep.mubr.bf16.mxu0 0
    %576 = vmatmul.mubr.bf16.gmra.mrb[0].mxu0 %v541
    %v577 = vpop.f32.mrb[0].mxu0
    %v578 = vadd.f32 0.0, %v577
    %v579 = vpop.f32.mrb[0].mxu0
    %v580 = vpop.f32.mrb[0].mxu0
    %v581 = vpop.f32.mrb[0].mxu0
    %582 = vdwg.mxu0
    %v583 = vadd.f32 %v146, %v578
    %v584 = vxor.u32 %v583, 2147483648
    %v585 = vmul.f32 %v584, 1.442695
    %v586 = vpow.pop %v585
    %v587 = vadd.f32 %v586, 1.0
    %v588 = vrcp.pop %v587
    %v589 = vmul.f32 1.0, %v588
    %v590 = vtanh.pop %v583
    %v591 = vmul.f32 %v589, %v529
    %593 = vrot.lane.b32.xlu0 %v590, 64
    %v594 = vpop.permute.xlu0 %593
    %v596 = vmul.f32 %v589, %v594
    %598 = vrot.lane.b32.xlu0 %v596, 32
    %v599 = vpop.permute.xlu0 %598
    %v601 = vadd.f32 %v591, %v599
    %v602 = vtanh.pop %v601
    %604 = vrot.lane.b32.xlu0 %v602, 64
    %v605 = vpop.permute.xlu0 %604
    %v607 = vmul.f32 %v589, %v605
    %v608 = vpack.c.bf16 %v607, %v607
    %610 = vrot.lane.b32.xlu0 %v608, 32
    %v611 = vpop.permute.xlu0 %610
    %v613 = vsel %vm79, %v611, 0
    %615 = vmatprep.subr.bf16.mxu0 0
    %616 = vmatpush1.bf16.msra.mxu0 %v172
    %617 = vmatprep.subr.bf16.mxu0 0
    %618 = vmatpush1.bf16.msra.mxu0 %v173
    %619 = vmatprep.subr.bf16.mxu0 0
    %620 = vmatpush1.bf16.msra.mxu0 0
    %621 = vmatprep.subr.bf16.mxu0 0
    %622 = vmatpush1.bf16.msra.mxu0 0
    %623 = vmatprep.subr.bf16.mxu0 0
    %624 = vmatpush1.bf16.msra.mxu0 0
    %625 = vmatprep.subr.bf16.mxu0 0
    %626 = vmatpush1.bf16.msra.mxu0 0
    %627 = vmatprep.subr.bf16.mxu0 0
    %628 = vmatpush1.bf16.msra.mxu0 0
    %629 = vmatprep.subr.bf16.mxu0 0
    %630 = vmatpush1.bf16.msra.mxu0 0
    %631 = vmatprep.subr.bf16.mxu0 0
    %632 = vmatpush1.bf16.msra.mxu0 0
    %633 = vmatprep.subr.bf16.mxu0 0
    %634 = vmatpush1.bf16.msra.mxu0 0
    %635 = vmatprep.subr.bf16.mxu0 0
    %636 = vmatpush1.bf16.msra.mxu0 0
    %637 = vmatprep.subr.bf16.mxu0 0
    %638 = vmatpush1.bf16.msra.mxu0 0
    %639 = vmatprep.subr.bf16.mxu0 0
    %640 = vmatpush1.bf16.msra.mxu0 0
    %641 = vmatprep.subr.bf16.mxu0 0
    %642 = vmatpush1.bf16.msra.mxu0 0
    %643 = vmatprep.subr.bf16.mxu0 0
    %644 = vmatpush1.bf16.msra.mxu0 0
    %645 = vmatprep.subr.bf16.mxu0 0
    %646 = vmatpush1.bf16.msra.mxu0 0
    %647 = vmatprep.mubr.bf16.mxu0 0
    %648 = vmatmul.mubr.bf16.gmra.mrb[0].mxu0 %v613
    %v649 = vpop.f32.mrb[0].mxu0
    %v650 = vadd.f32 0.0, %v649
    %v651 = vpop.f32.mrb[0].mxu0
    %v652 = vpop.f32.mrb[0].mxu0
    %v653 = vpop.f32.mrb[0].mxu0
    %654 = vdwg.mxu0
    %v655 = vadd.f32 %v151, %v650
    %v656 = vxor.u32 %v655, 2147483648
    %v657 = vmul.f32 %v656, 1.442695
    %v658 = vpow.pop %v657
    %v659 = vadd.f32 %v658, 1.0
    %v660 = vrcp.pop %v659
    %v661 = vmul.f32 1.0, %v660
    %v662 = vtanh.pop %v655
    %v663 = vmul.f32 %v661, %v601
    %665 = vrot.lane.b32.xlu0 %v662, 64
    %v666 = vpop.permute.xlu0 %665
    %v668 = vmul.f32 %v661, %v666
    %670 = vrot.lane.b32.xlu0 %v668, 32
    %v671 = vpop.permute.xlu0 %670
    %v673 = vadd.f32 %v663, %v671
    %v674 = vtanh.pop %v673
    %676 = vrot.lane.b32.xlu0 %v674, 64
    %v677 = vpop.permute.xlu0 %676
    %v679 = vmul.f32 %v661, %v677
    %v680 = vpack.c.bf16 %v679, %v679
    %682 = vrot.lane.b32.xlu0 %v680, 32
    %v683 = vpop.permute.xlu0 %682
    %v685 = vsel %vm79, %v683, 0
    %687 = vmatprep.subr.bf16.mxu0 0
    %688 = vmatpush1.bf16.msra.mxu0 %v172
    %689 = vmatprep.subr.bf16.mxu0 0
    %690 = vmatpush1.bf16.msra.mxu0 %v173
    %691 = vmatprep.subr.bf16.mxu0 0
    %692 = vmatpush1.bf16.msra.mxu0 0
    %693 = vmatprep.subr.bf16.mxu0 0
    %694 = vmatpush1.bf16.msra.mxu0 0
    %695 = vmatprep.subr.bf16.mxu0 0
    %696 = vmatpush1.bf16.msra.mxu0 0
    %697 = vmatprep.subr.bf16.mxu0 0
    %698 = vmatpush1.bf16.msra.mxu0 0
    %699 = vmatprep.subr.bf16.mxu0 0
    %700 = vmatpush1.bf16.msra.mxu0 0
    %701 = vmatprep.subr.bf16.mxu0 0
    %702 = vmatpush1.bf16.msra.mxu0 0
    %703 = vmatprep.subr.bf16.mxu0 0
    %704 = vmatpush1.bf16.msra.mxu0 0
    %705 = vmatprep.subr.bf16.mxu0 0
    %706 = vmatpush1.bf16.msra.mxu0 0
    %707 = vmatprep.subr.bf16.mxu0 0
    %708 = vmatpush1.bf16.msra.mxu0 0
    %709 = vmatprep.subr.bf16.mxu0 0
    %710 = vmatpush1.bf16.msra.mxu0 0
    %711 = vmatprep.subr.bf16.mxu0 0
    %712 = vmatpush1.bf16.msra.mxu0 0
    %713 = vmatprep.subr.bf16.mxu0 0
    %714 = vmatpush1.bf16.msra.mxu0 0
    %715 = vmatprep.subr.bf16.mxu0 0
    %716 = vmatpush1.bf16.msra.mxu0 0
    %717 = vmatprep.subr.bf16.mxu0 0
    %718 = vmatpush1.bf16.msra.mxu0 0
    %719 = vmatprep.mubr.bf16.mxu0 0
    %720 = vmatmul.mubr.bf16.gmra.mrb[0].mxu0 %v685
    %v721 = vpop.f32.mrb[0].mxu0
    %v722 = vadd.f32 0.0, %v721
    %v723 = vpop.f32.mrb[0].mxu0
    %v724 = vpop.f32.mrb[0].mxu0
    %v725 = vpop.f32.mrb[0].mxu0
    %726 = vdwg.mxu0
    %v727 = vadd.f32 %v154, %v722
    %v728 = vxor.u32 %v727, 2147483648
    %v729 = vmul.f32 %v728, 1.442695
    %v730 = vpow.pop %v729
    %v731 = vadd.f32 %v730, 1.0
    %v732 = vrcp.pop %v731
    %v733 = vmul.f32 1.0, %v732
    %v734 = vtanh.pop %v727
    %v735 = vmul.f32 %v733, %v673
    %737 = vrot.lane.b32.xlu0 %v734, 64
    %v738 = vpop.permute.xlu0 %737
    %v740 = vmul.f32 %v733, %v738
    %742 = vrot.lane.b32.xlu0 %v740, 32
    %v743 = vpop.permute.xlu0 %742
    %v745 = vadd.f32 %v735, %v743
    %v746 = vtanh.pop %v745
    %748 = vrot.lane.b32.xlu0 %v746, 64
    %v749 = vpop.permute.xlu0 %748
    %v751 = vmul.f32 %v733, %v749
    %753 = vrot.lane.b32.xlu0 %v751, 32
    %v754 = vpop.permute.xlu0 %753
    %756 = vst.msk [vmem:[#allocation5] sm:$0xff] %vm79, %v754
    %758 = vrot.lane.b32.xlu0 %v745, 96
    %v759 = vpop.permute.xlu0 %758
    %761 = vst.msk [vmem:[#allocation7] sm:$0xff] %vm79, %v759
    %v762 = vpack.c.bf16 %v319, %v247
    %v763 = vpack.c.bf16 %v463, %v391
    %v764 = vpack.c.bf16 %v607, %v535
    %v765 = vpack.c.bf16 %v751, %v679
    %v766 = vld [vmem:[%s4] sm:$0xf]
    %v767 = vld [vmem:[%s4 + $0x4] sm:$0xf]
    %v768 = vld [vmem:[%s4 + $0x8] sm:$0xf]
    %v769 = vld [vmem:[%s4 + $0xc] sm:$0xf]
    %v770 = vld [vmem:[%s6] sm:$0x1]
    %v772 = vlaneseq
    %v773 = vshrl.u32 %v772, 7
    %v774 = vsub.s32 0, %v773
    %v775 = vrot.slane %v770, %v774
    %781 = vrot.lane.b32.xlu0 %v762, 32
    %v782 = vpop.permute.xlu0 %781
    %783 = vrot.lane.b32.xlu0 %v763, 32
    %v784 = vpop.permute.xlu0 %783
    %785 = vrot.lane.b32.xlu0 %v764, 32
    %v786 = vpop.permute.xlu0 %785
    %787 = vrot.lane.b32.xlu0 %v765, 32
    %v788 = vpop.permute.xlu0 %787
    %v793 = vunpack.c.l.b16 %v766
    %v794 = vunpack.c.l.b16 %v767
    %v795 = vunpack.c.l.b16 %v768
    %v796 = vunpack.c.l.b16 %v769
    %v797 = vpack.c.b16 %v794, %v793
    %v798 = vpack.c.b16 %v796, %v795
    %v802 = vsel %vm79, %v782, 0
    %v805 = vsel %vm79, %v784, 0
    %v808 = vsel %vm79, %v786, 0
    %v811 = vsel %vm79, %v788, 0
    %813 = vmatprep.subr.bf16.mxu0 0
    %814 = vmatpush1.bf16.msra.mxu0 %v797
    %815 = vmatprep.subr.bf16.mxu0 0
    %816 = vmatpush1.bf16.msra.mxu0 %v798
    %817 = vmatprep.subr.bf16.mxu0 0
    %818 = vmatpush1.bf16.msra.mxu0 0
    %819 = vmatprep.subr.bf16.mxu0 0
    %820 = vmatpush1.bf16.msra.mxu0 0
    %821 = vmatprep.subr.bf16.mxu0 0
    %822 = vmatpush1.bf16.msra.mxu0 0
    %823 = vmatprep.subr.bf16.mxu0 0
    %824 = vmatpush1.bf16.msra.mxu0 0
    %825 = vmatprep.subr.bf16.mxu0 0
    %826 = vmatpush1.bf16.msra.mxu0 0
    %827 = vmatprep.subr.bf16.mxu0 0
    %828 = vmatpush1.bf16.msra.mxu0 0
    %829 = vmatprep.subr.bf16.mxu0 0
    %830 = vmatpush1.bf16.msra.mxu0 0
    %831 = vmatprep.subr.bf16.mxu0 0
    %832 = vmatpush1.bf16.msra.mxu0 0
    %833 = vmatprep.subr.bf16.mxu0 0
    %834 = vmatpush1.bf16.msra.mxu0 0
    %835 = vmatprep.subr.bf16.mxu0 0
    %836 = vmatpush1.bf16.msra.mxu0 0
    %837 = vmatprep.subr.bf16.mxu0 0
    %838 = vmatpush1.bf16.msra.mxu0 0
    %839 = vmatprep.subr.bf16.mxu0 0
    %840 = vmatpush1.bf16.msra.mxu0 0
    %841 = vmatprep.subr.bf16.mxu0 0
    %842 = vmatpush1.bf16.msra.mxu0 0
    %843 = vmatprep.subr.bf16.mxu0 0
    %844 = vmatpush1.bf16.msra.mxu0 0
    %845 = vmatprep.mubr.bf16.mxu0 0
    %846 = vmatmul.mubr.bf16.gmra.mrb[0].mxu0 %v802
    %v847 = vpop.f32.mrb[0].mxu0
    %v848 = vadd.f32 %v775, %v847
    %v849 = vpop.f32.mrb[0].mxu0
    %v850 = vpop.f32.mrb[0].mxu0
    %v851 = vadd.f32 %v775, %v850
    %v852 = vpop.f32.mrb[0].mxu0
    %853 = vmatprep.mubr.bf16.mxu0 0
    %854 = vmatmul.mubr.bf16.gmra.mrb[0].mxu0 %v805
    %v855 = vpop.f32.mrb[0].mxu0
    %v856 = vadd.f32 %v775, %v855
    %v857 = vpop.f32.mrb[0].mxu0
    %v858 = vpop.f32.mrb[0].mxu0
    %v859 = vadd.f32 %v775, %v858
    %v860 = vpop.f32.mrb[0].mxu0
    %861 = vmatprep.mubr.bf16.mxu0 0
    %862 = vmatmul.mubr.bf16.gmra.mrb[0].mxu0 %v808
    %v863 = vpop.f32.mrb[0].mxu0
    %v864 = vadd.f32 %v775, %v863
    %v865 = vpop.f32.mrb[0].mxu0
    %v866 = vpop.f32.mrb[0].mxu0
    %v867 = vadd.f32 %v775, %v866
    %v868 = vpop.f32.mrb[0].mxu0
    %869 = vmatprep.mubr.bf16.mxu0 0
    %870 = vmatmul.mubr.bf16.gmra.mrb[0].mxu0 %v811
    %v871 = vpop.f32.mrb[0].mxu0
    %v872 = vadd.f32 %v775, %v871
    %v873 = vpop.f32.mrb[0].mxu0
    %v874 = vpop.f32.mrb[0].mxu0
    %v875 = vadd.f32 %v775, %v874
    %v876 = vpop.f32.mrb[0].mxu0
    %877 = vdwg.mxu0
    %v878 = vld [vmem:[%s5] sm:$0xf]
    %v879 = vld [vmem:[%s5 + $0x4] sm:$0xf]
    %v880 = vld [vmem:[%s5 + $0x8] sm:$0xf]
    %v881 = vld [vmem:[%s5 + $0xc] sm:$0xf]
    %s882 = scalar_lea.vmem %s9, 8
    %v883 = vld [vmem:[%s882] sm:$0xff]
    %s884 = scalar_lea.vmem %s10, 8
    %v885 = vld [vmem:[%s884] sm:$0xff]
    %v886 = vpack.c.bf16 %v883, %v883
    %v891 = vunpack.c.l.b16 %v878
    %v892 = vunpack.c.l.b16 %v879
    %v893 = vunpack.c.l.b16 %v880
    %v894 = vunpack.c.l.b16 %v881
    %v895 = vpack.c.b16 %v892, %v891
    %v896 = vpack.c.b16 %v894, %v893
    %v900 = vsel %vm79, %v886, 0
    %902 = vmatprep.subr.bf16.mxu0 0
    %903 = vmatpush1.bf16.msra.mxu0 %v895
    %904 = vmatprep.subr.bf16.mxu0 0
    %905 = vmatpush1.bf16.msra.mxu0 %v896
    %906 = vmatprep.subr.bf16.mxu0 0
    %907 = vmatpush1.bf16.msra.mxu0 0
    %908 = vmatprep.subr.bf16.mxu0 0
    %909 = vmatpush1.bf16.msra.mxu0 0
    %910 = vmatprep.subr.bf16.mxu0 0
    %911 = vmatpush1.bf16.msra.mxu0 0
    %912 = vmatprep.subr.bf16.mxu0 0
    %913 = vmatpush1.bf16.msra.mxu0 0
    %914 = vmatprep.subr.bf16.mxu0 0
    %915 = vmatpush1.bf16.msra.mxu0 0
    %916 = vmatprep.subr.bf16.mxu0 0
    %917 = vmatpush1.bf16.msra.mxu0 0
    %918 = vmatprep.subr.bf16.mxu0 0
    %919 = vmatpush1.bf16.msra.mxu0 0
    %920 = vmatprep.subr.bf16.mxu0 0
    %921 = vmatpush1.bf16.msra.mxu0 0
    %922 = vmatprep.subr.bf16.mxu0 0
    %923 = vmatpush1.bf16.msra.mxu0 0
    %924 = vmatprep.subr.bf16.mxu0 0
    %925 = vmatpush1.bf16.msra.mxu0 0
    %926 = vmatprep.subr.bf16.mxu0 0
    %927 = vmatpush1.bf16.msra.mxu0 0
    %928 = vmatprep.subr.bf16.mxu0 0
    %929 = vmatpush1.bf16.msra.mxu0 0
    %930 = vmatprep.subr.bf16.mxu0 0
    %931 = vmatpush1.bf16.msra.mxu0 0
    %932 = vmatprep.subr.bf16.mxu0 0
    %933 = vmatpush1.bf16.msra.mxu0 0
    %934 = vmatprep.mubr.bf16.mxu0 0
    %935 = vmatmul.mubr.bf16.gmra.mrb[0].mxu0 %v900
    %v936 = vpop.f32.mrb[0].mxu0
    %v937 = vadd.f32 0.0, %v936
    %v938 = vpop.f32.mrb[0].mxu0
    %v939 = vpop.f32.mrb[0].mxu0
    %v940 = vpop.f32.mrb[0].mxu0
    %941 = vdwg.mxu0
    %v942 = vadd.f32 %v848, %v937
    %v943 = vxor.u32 %v942, 2147483648
    %v944 = vmul.f32 %v943, 1.442695
    %v945 = vpow.pop %v944
    %v946 = vadd.f32 %v945, 1.0
    %v947 = vrcp.pop %v946
    %v948 = vmul.f32 1.0, %v947
    %v949 = vtanh.pop %v942
    %951 = vrot.lane.b32.xlu0 %v885, 32
    %v952 = vpop.permute.xlu0 %951
    %v954 = vmul.f32 %v948, %v952
    %956 = vrot.lane.b32.xlu0 %v949, 64
    %v957 = vpop.permute.xlu0 %956
    %v959 = vmul.f32 %v948, %v957
    %961 = vrot.lane.b32.xlu0 %v959, 32
    %v962 = vpop.permute.xlu0 %961
    %v964 = vadd.f32 %v954, %v962
    %v965 = vtanh.pop %v964
    %967 = vrot.lane.b32.xlu0 %v965, 64
    %v968 = vpop.permute.xlu0 %967
    %v970 = vmul.f32 %v948, %v968
    %v972 = vcombine.high %v970, %v970
    %v974 = vunpack.c.l.s4 1966171168
    %v975 = vunpack.c.0.s8 %v974
    %v976 = vlaneseq
    %v977 = vshrl.u32 %v976, 7
    %v978 = vsub.s32 %v975, %v977
    %v979 = vrot.slane %v970, %v978
    %v981 = vunpack.c.l.s4 1966171168
    %v982 = vunpack.c.0.s8 %v981
    %v983 = vlaneseq
    %v984 = vshrl.u32 %v983, 7
    %v985 = vsub.s32 %v982, %v984
    %v986 = vrot.slane %v972, %v985
    %v987 = vcombine.high %v979, %v979
    %v988 = vcombine.high %v986, %v986
    %v990 = vunpack.c.l.s4 1966171168
    %v991 = vunpack.c.0.s8 %v990
    %v992 = vlaneseq
    %v993 = vshrl.u32 %v992, 7
    %v994 = vsub.s32 %v991, %v993
    %v995 = vrot.slane %v979, %v994
    %v997 = vunpack.c.l.s4 1966171168
    %v998 = vunpack.c.0.s8 %v997
    %v999 = vlaneseq
    %v1000 = vshrl.u32 %v999, 7
    %v1001 = vsub.s32 %v998, %v1000
    %v1002 = vrot.slane %v986, %v1001
    %v1004 = vunpack.c.l.s4 1966171168
    %v1005 = vunpack.c.0.s8 %v1004
    %v1006 = vlaneseq
    %v1007 = vshrl.u32 %v1006, 7
    %v1008 = vsub.s32 %v1005, %v1007
    %v1009 = vrot.slane %v987, %v1008
    %v1011 = vunpack.c.l.s4 1966171168
    %v1012 = vunpack.c.0.s8 %v1011
    %v1013 = vlaneseq
    %v1014 = vshrl.u32 %v1013, 7
    %v1015 = vsub.s32 %v1012, %v1014
    %v1016 = vrot.slane %v988, %v1015
    %v1017 = vcombine.high %v995, %v995
    %v1018 = vcombine.high %v1002, %v1002
    %v1019 = vcombine.high %v1009, %v1009
    %v1020 = vcombine.high %v1016, %v1016
    %v1021 = vlaneseq
    %v1022 = vshrl.u32 %v1021, 7
    %v1023 = vsub.s32 0, %v1022
    %v1024 = vrot.slane %v995, %v1023
    %v1025 = vlaneseq
    %v1026 = vshrl.u32 %v1025, 7
    %v1027 = vsub.s32 0, %v1026
    %v1028 = vrot.slane %v1009, %v1027
    %v1029 = vlaneseq
    %v1030 = vshrl.u32 %v1029, 7
    %v1031 = vsub.s32 0, %v1030
    %v1032 = vrot.slane %v1017, %v1031
    %v1033 = vlaneseq
    %v1034 = vshrl.u32 %v1033, 7
    %v1035 = vsub.s32 0, %v1034
    %v1036 = vrot.slane %v1019, %v1035
    %v1037 = vlaneseq
    %v1038 = vshrl.u32 %v1037, 7
    %v1039 = vsub.s32 0, %v1038
    %v1040 = vrot.slane %v1002, %v1039
    %v1041 = vlaneseq
    %v1042 = vshrl.u32 %v1041, 7
    %v1043 = vsub.s32 0, %v1042
    %v1044 = vrot.slane %v1016, %v1043
    %v1045 = vlaneseq
    %v1046 = vshrl.u32 %v1045, 7
    %v1047 = vsub.s32 0, %v1046
    %v1048 = vrot.slane %v1018, %v1047
    %v1049 = vlaneseq
    %v1050 = vshrl.u32 %v1049, 7
    %v1051 = vsub.s32 0, %v1050
    %v1052 = vrot.slane %v1020, %v1051
    %1053 = vrot.lane.b32.xlu0 %v1024, 32
    %v1054 = vpop.permute.xlu0 %1053
    %1055 = vrot.lane.b32.xlu0 %v1028, 32
    %v1056 = vpop.permute.xlu0 %1055
    %1057 = vrot.lane.b32.xlu0 %v1032, 32
    %v1058 = vpop.permute.xlu0 %1057
    %1059 = vrot.lane.b32.xlu0 %v1036, 32
    %v1060 = vpop.permute.xlu0 %1059
    %1061 = vrot.lane.b32.xlu0 %v1040, 32
    %v1062 = vpop.permute.xlu0 %1061
    %1063 = vrot.lane.b32.xlu0 %v1044, 32
    %v1064 = vpop.permute.xlu0 %1063
    %1065 = vrot.lane.b32.xlu0 %v1048, 32
    %v1066 = vpop.permute.xlu0 %1065
    %1067 = vrot.lane.b32.xlu0 %v1052, 32
    %v1068 = vpop.permute.xlu0 %1067
    %vm1077 = vcmask 253952
    %1078 = vst.msk [vmem:[#allocation2] sm:$0x1] %vm1077, %v1054
    %1079 = vst.msk [vmem:[#allocation2 + $0x8] sm:$0x1] %vm1077, %v1056
    %1080 = vst.msk [vmem:[#allocation2 + $0x10] sm:$0x1] %vm1077, %v1058
    %1081 = vst.msk [vmem:[#allocation2 + $0x18] sm:$0x1] %vm1077, %v1060
    %1082 = vst.msk [vmem:[#allocation2 + $0x20] sm:$0x1] %vm1077, %v1062
    %1083 = vst.msk [vmem:[#allocation2 + $0x28] sm:$0x1] %vm1077, %v1064
    %1084 = vst.msk [vmem:[#allocation2 + $0x30] sm:$0x1] %vm1077, %v1066
    %1085 = vst.msk [vmem:[#allocation2 + $0x38] sm:$0x1] %vm1077, %v1068
    %v1086 = vpack.c.bf16 %v970, %v970
    %1088 = vrot.lane.b32.xlu0 %v1086, 32
    %v1089 = vpop.permute.xlu0 %1088
    %v1091 = vsel %vm79, %v1089, 0
    %1093 = vmatprep.subr.bf16.mxu0 0
    %1094 = vmatpush1.bf16.msra.mxu0 %v895
    %1095 = vmatprep.subr.bf16.mxu0 0
    %1096 = vmatpush1.bf16.msra.mxu0 %v896
    %1097 = vmatprep.subr.bf16.mxu0 0
    %1098 = vmatpush1.bf16.msra.mxu0 0
    %1099 = vmatprep.subr.bf16.mxu0 0
    %1100 = vmatpush1.bf16.msra.mxu0 0
    %1101 = vmatprep.subr.bf16.mxu0 0
    %1102 = vmatpush1.bf16.msra.mxu0 0
    %1103 = vmatprep.subr.bf16.mxu0 0
    %1104 = vmatpush1.bf16.msra.mxu0 0
    %1105 = vmatprep.subr.bf16.mxu0 0
    %1106 = vmatpush1.bf16.msra.mxu0 0
    %1107 = vmatprep.subr.bf16.mxu0 0
    %1108 = vmatpush1.bf16.msra.mxu0 0
    %1109 = vmatprep.subr.bf16.mxu0 0
    %1110 = vmatpush1.bf16.msra.mxu0 0
    %1111 = vmatprep.subr.bf16.mxu0 0
    %1112 = vmatpush1.bf16.msra.mxu0 0
    %1113 = vmatprep.subr.bf16.mxu0 0
    %1114 = vmatpush1.bf16.msra.mxu0 0
    %1115 = vmatprep.subr.bf16.mxu0 0
    %1116 = vmatpush1.bf16.msra.mxu0 0
    %1117 = vmatprep.subr.bf16.mxu0 0
    %1118 = vmatpush1.bf16.msra.mxu0 0
    %1119 = vmatprep.subr.bf16.mxu0 0
    %1120 = vmatpush1.bf16.msra.mxu0 0
    %1121 = vmatprep.subr.bf16.mxu0 0
    %1122 = vmatpush1.bf16.msra.mxu0 0
    %1123 = vmatprep.subr.bf16.mxu0 0
    %1124 = vmatpush1.bf16.msra.mxu0 0
    %1125 = vmatprep.mubr.bf16.mxu0 0
    %1126 = vmatmul.mubr.bf16.gmra.mrb[0].mxu0 %v1091
    %v1127 = vpop.f32.mrb[0].mxu0
    %v1128 = vadd.f32 0.0, %v1127
    %v1129 = vpop.f32.mrb[0].mxu0
    %v1130 = vpop.f32.mrb[0].mxu0
    %v1131 = vpop.f32.mrb[0].mxu0
    %1132 = vdwg.mxu0
    %v1133 = vadd.f32 %v851, %v1128
    %v1134 = vxor.u32 %v1133, 2147483648
    %v1135 = vmul.f32 %v1134, 1.442695
    %v1136 = vpow.pop %v1135
    %v1137 = vadd.f32 %v1136, 1.0
    %v1138 = vrcp.pop %v1137
    %v1139 = vmul.f32 1.0, %v1138
    %v1140 = vtanh.pop %v1133
    %v1141 = vmul.f32 %v1139, %v964
    %1143 = vrot.lane.b32.xlu0 %v1140, 64
    %v1144 = vpop.permute.xlu0 %1143
    %v1146 = vmul.f32 %v1139, %v1144
    %1148 = vrot.lane.b32.xlu0 %v1146, 32
    %v1149 = vpop.permute.xlu0 %1148
    %v1151 = vadd.f32 %v1141, %v1149
    %v1152 = vtanh.pop %v1151
    %1154 = vrot.lane.b32.xlu0 %v1152, 64
    %v1155 = vpop.permute.xlu0 %1154
    %v1157 = vmul.f32 %v1139, %v1155
    %v1159 = vcombine.high %v1157, %v1157
    %v1161 = vunpack.c.l.s4 1966171168
    %v1162 = vunpack.c.0.s8 %v1161
    %v1163 = vlaneseq
    %v1164 = vshrl.u32 %v1163, 7
    %v1165 = vsub.s32 %v1162, %v1164
    %v1166 = vrot.slane %v1157, %v1165
    %v1168 = vunpack.c.l.s4 1966171168
    %v1169 = vunpack.c.0.s8 %v1168
    %v1170 = vlaneseq
    %v1171 = vshrl.u32 %v1170, 7
    %v1172 = vsub.s32 %v1169, %v1171
    %v1173 = vrot.slane %v1159, %v1172
    %v1174 = vcombine.high %v1166, %v1166
    %v1175 = vcombine.high %v1173, %v1173
    %v1177 = vunpack.c.l.s4 1966171168
    %v1178 = vunpack.c.0.s8 %v1177
    %v1179 = vlaneseq
    %v1180 = vshrl.u32 %v1179, 7
    %v1181 = vsub.s32 %v1178, %v1180
    %v1182 = vrot.slane %v1166, %v1181
    %v1184 = vunpack.c.l.s4 1966171168
    %v1185 = vunpack.c.0.s8 %v1184
    %v1186 = vlaneseq
    %v1187 = vshrl.u32 %v1186, 7
    %v1188 = vsub.s32 %v1185, %v1187
    %v1189 = vrot.slane %v1173, %v1188
    %v1191 = vunpack.c.l.s4 1966171168
    %v1192 = vunpack.c.0.s8 %v1191
    %v1193 = vlaneseq
    %v1194 = vshrl.u32 %v1193, 7
    %v1195 = vsub.s32 %v1192, %v1194
    %v1196 = vrot.slane %v1174, %v1195
    %v1198 = vunpack.c.l.s4 1966171168
    %v1199 = vunpack.c.0.s8 %v1198
    %v1200 = vlaneseq
    %v1201 = vshrl.u32 %v1200, 7
    %v1202 = vsub.s32 %v1199, %v1201
    %v1203 = vrot.slane %v1175, %v1202
    %v1204 = vcombine.high %v1182, %v1182
    %v1205 = vcombine.high %v1189, %v1189
    %v1206 = vcombine.high %v1196, %v1196
    %v1207 = vcombine.high %v1203, %v1203
    %v1208 = vlaneseq
    %v1209 = vshrl.u32 %v1208, 7
    %v1210 = vsub.s32 0, %v1209
    %v1211 = vrot.slane %v1182, %v1210
    %v1212 = vlaneseq
    %v1213 = vshrl.u32 %v1212, 7
    %v1214 = vsub.s32 0, %v1213
    %v1215 = vrot.slane %v1196, %v1214
    %v1216 = vlaneseq
    %v1217 = vshrl.u32 %v1216, 7
    %v1218 = vsub.s32 0, %v1217
    %v1219 = vrot.slane %v1204, %v1218
    %v1220 = vlaneseq
    %v1221 = vshrl.u32 %v1220, 7
    %v1222 = vsub.s32 0, %v1221
    %v1223 = vrot.slane %v1206, %v1222
    %v1224 = vlaneseq
    %v1225 = vshrl.u32 %v1224, 7
    %v1226 = vsub.s32 0, %v1225
    %v1227 = vrot.slane %v1189, %v1226
    %v1228 = vlaneseq
    %v1229 = vshrl.u32 %v1228, 7
    %v1230 = vsub.s32 0, %v1229
    %v1231 = vrot.slane %v1203, %v1230
    %v1232 = vlaneseq
    %v1233 = vshrl.u32 %v1232, 7
    %v1234 = vsub.s32 0, %v1233
    %v1235 = vrot.slane %v1205, %v1234
    %v1236 = vlaneseq
    %v1237 = vshrl.u32 %v1236, 7
    %v1238 = vsub.s32 0, %v1237
    %v1239 = vrot.slane %v1207, %v1238
    %1240 = vrot.lane.b32.xlu0 %v1211, 32
    %v1241 = vpop.permute.xlu0 %1240
    %1242 = vrot.lane.b32.xlu0 %v1215, 32
    %v1243 = vpop.permute.xlu0 %1242
    %1244 = vrot.lane.b32.xlu0 %v1219, 32
    %v1245 = vpop.permute.xlu0 %1244
    %1246 = vrot.lane.b32.xlu0 %v1223, 32
    %v1247 = vpop.permute.xlu0 %1246
    %1248 = vrot.lane.b32.xlu0 %v1227, 32
    %v1249 = vpop.permute.xlu0 %1248
    %1250 = vrot.lane.b32.xlu0 %v1231, 32
    %v1251 = vpop.permute.xlu0 %1250
    %1252 = vrot.lane.b32.xlu0 %v1235, 32
    %v1253 = vpop.permute.xlu0 %1252
    %1254 = vrot.lane.b32.xlu0 %v1239, 32
    %v1255 = vpop.permute.xlu0 %1254
    %1264 = vst.msk [vmem:[#allocation2 + $0x1] sm:$0x1] %vm1077, %v1241
    %1265 = vst.msk [vmem:[#allocation2 + $0x9] sm:$0x1] %vm1077, %v1243
    %1266 = vst.msk [vmem:[#allocation2 + $0x11] sm:$0x1] %vm1077, %v1245
    %1267 = vst.msk [vmem:[#allocation2 + $0x19] sm:$0x1] %vm1077, %v1247
    %1268 = vst.msk [vmem:[#allocation2 + $0x21] sm:$0x1] %vm1077, %v1249
    %1269 = vst.msk [vmem:[#allocation2 + $0x29] sm:$0x1] %vm1077, %v1251
    %1270 = vst.msk [vmem:[#allocation2 + $0x31] sm:$0x1] %vm1077, %v1253
    %1271 = vst.msk [vmem:[#allocation2 + $0x39] sm:$0x1] %vm1077, %v1255
    %v1272 = vpack.c.bf16 %v1157, %v1157
    %1274 = vrot.lane.b32.xlu0 %v1272, 32
    %v1275 = vpop.permute.xlu0 %1274
    %v1277 = vsel %vm79, %v1275, 0
    %1279 = vmatprep.subr.bf16.mxu0 0
    %1280 = vmatpush1.bf16.msra.mxu0 %v895
    %1281 = vmatprep.subr.bf16.mxu0 0
    %1282 = vmatpush1.bf16.msra.mxu0 %v896
    %1283 = vmatprep.subr.bf16.mxu0 0
    %1284 = vmatpush1.bf16.msra.mxu0 0
    %1285 = vmatprep.subr.bf16.mxu0 0
    %1286 = vmatpush1.bf16.msra.mxu0 0
    %1287 = vmatprep.subr.bf16.mxu0 0
    %1288 = vmatpush1.bf16.msra.mxu0 0
    %1289 = vmatprep.subr.bf16.mxu0 0
    %1290 = vmatpush1.bf16.msra.mxu0 0
    %1291 = vmatprep.subr.bf16.mxu0 0
    %1292 = vmatpush1.bf16.msra.mxu0 0
    %1293 = vmatprep.subr.bf16.mxu0 0
    %1294 = vmatpush1.bf16.msra.mxu0 0
    %1295 = vmatprep.subr.bf16.mxu0 0
    %1296 = vmatpush1.bf16.msra.mxu0 0
    %1297 = vmatprep.subr.bf16.mxu0 0
    %1298 = vmatpush1.bf16.msra.mxu0 0
    %1299 = vmatprep.subr.bf16.mxu0 0
    %1300 = vmatpush1.bf16.msra.mxu0 0
    %1301 = vmatprep.subr.bf16.mxu0 0
    %1302 = vmatpush1.bf16.msra.mxu0 0
    %1303 = vmatprep.subr.bf16.mxu0 0
    %1304 = vmatpush1.bf16.msra.mxu0 0
    %1305 = vmatprep.subr.bf16.mxu0 0
    %1306 = vmatpush1.bf16.msra.mxu0 0
    %1307 = vmatprep.subr.bf16.mxu0 0
    %1308 = vmatpush1.bf16.msra.mxu0 0
    %1309 = vmatprep.subr.bf16.mxu0 0
    %1310 = vmatpush1.bf16.msra.mxu0 0
    %1311 = vmatprep.mubr.bf16.mxu0 0
    %1312 = vmatmul.mubr.bf16.gmra.mrb[0].mxu0 %v1277
    %v1313 = vpop.f32.mrb[0].mxu0
    %v1314 = vadd.f32 0.0, %v1313
    %v1315 = vpop.f32.mrb[0].mxu0
    %v1316 = vpop.f32.mrb[0].mxu0
    %v1317 = vpop.f32.mrb[0].mxu0
    %1318 = vdwg.mxu0
    %v1319 = vadd.f32 %v856, %v1314
    %v1320 = vxor.u32 %v1319, 2147483648
    %v1321 = vmul.f32 %v1320, 1.442695
    %v1322 = vpow.pop %v1321
    %v1323 = vadd.f32 %v1322, 1.0
    %v1324 = vrcp.pop %v1323
    %v1325 = vmul.f32 1.0, %v1324
    %v1326 = vtanh.pop %v1319
    %v1327 = vmul.f32 %v1325, %v1151
    %1329 = vrot.lane.b32.xlu0 %v1326, 64
    %v1330 = vpop.permute.xlu0 %1329
    %v1332 = vmul.f32 %v1325, %v1330
    %1334 = vrot.lane.b32.xlu0 %v1332, 32
    %v1335 = vpop.permute.xlu0 %1334
    %v1337 = vadd.f32 %v1327, %v1335
    %v1338 = vtanh.pop %v1337
    %1340 = vrot.lane.b32.xlu0 %v1338, 64
    %v1341 = vpop.permute.xlu0 %1340
    %v1343 = vmul.f32 %v1325, %v1341
    %v1345 = vcombine.high %v1343, %v1343
    %v1347 = vunpack.c.l.s4 1966171168
    %v1348 = vunpack.c.0.s8 %v1347
    %v1349 = vlaneseq
    %v1350 = vshrl.u32 %v1349, 7
    %v1351 = vsub.s32 %v1348, %v1350
    %v1352 = vrot.slane %v1343, %v1351
    %v1354 = vunpack.c.l.s4 1966171168
    %v1355 = vunpack.c.0.s8 %v1354
    %v1356 = vlaneseq
    %v1357 = vshrl.u32 %v1356, 7
    %v1358 = vsub.s32 %v1355, %v1357
    %v1359 = vrot.slane %v1345, %v1358
    %v1360 = vcombine.high %v1352, %v1352
    %v1361 = vcombine.high %v1359, %v1359
    %v1363 = vunpack.c.l.s4 1966171168
    %v1364 = vunpack.c.0.s8 %v1363
    %v1365 = vlaneseq
    %v1366 = vshrl.u32 %v1365, 7
    %v1367 = vsub.s32 %v1364, %v1366
    %v1368 = vrot.slane %v1352, %v1367
    %v1370 = vunpack.c.l.s4 1966171168
    %v1371 = vunpack.c.0.s8 %v1370
    %v1372 = vlaneseq
    %v1373 = vshrl.u32 %v1372, 7
    %v1374 = vsub.s32 %v1371, %v1373
    %v1375 = vrot.slane %v1359, %v1374
    %v1377 = vunpack.c.l.s4 1966171168
    %v1378 = vunpack.c.0.s8 %v1377
    %v1379 = vlaneseq
    %v1380 = vshrl.u32 %v1379, 7
    %v1381 = vsub.s32 %v1378, %v1380
    %v1382 = vrot.slane %v1360, %v1381
    %v1384 = vunpack.c.l.s4 1966171168
    %v1385 = vunpack.c.0.s8 %v1384
    %v1386 = vlaneseq
    %v1387 = vshrl.u32 %v1386, 7
    %v1388 = vsub.s32 %v1385, %v1387
    %v1389 = vrot.slane %v1361, %v1388
    %v1390 = vcombine.high %v1368, %v1368
    %v1391 = vcombine.high %v1375, %v1375
    %v1392 = vcombine.high %v1382, %v1382
    %v1393 = vcombine.high %v1389, %v1389
    %v1394 = vlaneseq
    %v1395 = vshrl.u32 %v1394, 7
    %v1396 = vsub.s32 0, %v1395
    %v1397 = vrot.slane %v1368, %v1396
    %v1398 = vlaneseq
    %v1399 = vshrl.u32 %v1398, 7
    %v1400 = vsub.s32 0, %v1399
    %v1401 = vrot.slane %v1382, %v1400
    %v1402 = vlaneseq
    %v1403 = vshrl.u32 %v1402, 7
    %v1404 = vsub.s32 0, %v1403
    %v1405 = vrot.slane %v1390, %v1404
    %v1406 = vlaneseq
    %v1407 = vshrl.u32 %v1406, 7
    %v1408 = vsub.s32 0, %v1407
    %v1409 = vrot.slane %v1392, %v1408
    %v1410 = vlaneseq
    %v1411 = vshrl.u32 %v1410, 7
    %v1412 = vsub.s32 0, %v1411
    %v1413 = vrot.slane %v1375, %v1412
    %v1414 = vlaneseq
    %v1415 = vshrl.u32 %v1414, 7
    %v1416 = vsub.s32 0, %v1415
    %v1417 = vrot.slane %v1389, %v1416
    %v1418 = vlaneseq
    %v1419 = vshrl.u32 %v1418, 7
    %v1420 = vsub.s32 0, %v1419
    %v1421 = vrot.slane %v1391, %v1420
    %v1422 = vlaneseq
    %v1423 = vshrl.u32 %v1422, 7
    %v1424 = vsub.s32 0, %v1423
    %v1425 = vrot.slane %v1393, %v1424
    %1426 = vrot.lane.b32.xlu0 %v1397, 32
    %v1427 = vpop.permute.xlu0 %1426
    %1428 = vrot.lane.b32.xlu0 %v1401, 32
    %v1429 = vpop.permute.xlu0 %1428
    %1430 = vrot.lane.b32.xlu0 %v1405, 32
    %v1431 = vpop.permute.xlu0 %1430
    %1432 = vrot.lane.b32.xlu0 %v1409, 32
    %v1433 = vpop.permute.xlu0 %1432
    %1434 = vrot.lane.b32.xlu0 %v1413, 32
    %v1435 = vpop.permute.xlu0 %1434
    %1436 = vrot.lane.b32.xlu0 %v1417, 32
    %v1437 = vpop.permute.xlu0 %1436
    %1438 = vrot.lane.b32.xlu0 %v1421, 32
    %v1439 = vpop.permute.xlu0 %1438
    %1440 = vrot.lane.b32.xlu0 %v1425, 32
    %v1441 = vpop.permute.xlu0 %1440
    %1450 = vst.msk [vmem:[#allocation2 + $0x2] sm:$0x1] %vm1077, %v1427
    %1451 = vst.msk [vmem:[#allocation2 + $0xa] sm:$0x1] %vm1077, %v1429
    %1452 = vst.msk [vmem:[#allocation2 + $0x12] sm:$0x1] %vm1077, %v1431
    %1453 = vst.msk [vmem:[#allocation2 + $0x1a] sm:$0x1] %vm1077, %v1433
    %1454 = vst.msk [vmem:[#allocation2 + $0x22] sm:$0x1] %vm1077, %v1435
    %1455 = vst.msk [vmem:[#allocation2 + $0x2a] sm:$0x1] %vm1077, %v1437
    %1456 = vst.msk [vmem:[#allocation2 + $0x32] sm:$0x1] %vm1077, %v1439
    %1457 = vst.msk [vmem:[#allocation2 + $0x3a] sm:$0x1] %vm1077, %v1441
    %v1458 = vpack.c.bf16 %v1343, %v1343
    %1460 = vrot.lane.b32.xlu0 %v1458, 32
    %v1461 = vpop.permute.xlu0 %1460
    %v1463 = vsel %vm79, %v1461, 0
    %1465 = vmatprep.subr.bf16.mxu0 0
    %1466 = vmatpush1.bf16.msra.mxu0 %v895
    %1467 = vmatprep.subr.bf16.mxu0 0
    %1468 = vmatpush1.bf16.msra.mxu0 %v896
    %1469 = vmatprep.subr.bf16.mxu0 0
    %1470 = vmatpush1.bf16.msra.mxu0 0
    %1471 = vmatprep.subr.bf16.mxu0 0
    %1472 = vmatpush1.bf16.msra.mxu0 0
    %1473 = vmatprep.subr.bf16.mxu0 0
    %1474 = vmatpush1.bf16.msra.mxu0 0
    %1475 = vmatprep.subr.bf16.mxu0 0
    %1476 = vmatpush1.bf16.msra.mxu0 0
    %1477 = vmatprep.subr.bf16.mxu0 0
    %1478 = vmatpush1.bf16.msra.mxu0 0
    %1479 = vmatprep.subr.bf16.mxu0 0
    %1480 = vmatpush1.bf16.msra.mxu0 0
    %1481 = vmatprep.subr.bf16.mxu0 0
    %1482 = vmatpush1.bf16.msra.mxu0 0
    %1483 = vmatprep.subr.bf16.mxu0 0
    %1484 = vmatpush1.bf16.msra.mxu0 0
    %1485 = vmatprep.subr.bf16.mxu0 0
    %1486 = vmatpush1.bf16.msra.mxu0 0
    %1487 = vmatprep.subr.bf16.mxu0 0
    %1488 = vmatpush1.bf16.msra.mxu0 0
    %1489 = vmatprep.subr.bf16.mxu0 0
    %1490 = vmatpush1.bf16.msra.mxu0 0
    %1491 = vmatprep.subr.bf16.mxu0 0
    %1492 = vmatpush1.bf16.msra.mxu0 0
    %1493 = vmatprep.subr.bf16.mxu0 0
    %1494 = vmatpush1.bf16.msra.mxu0 0
    %1495 = vmatprep.subr.bf16.mxu0 0
    %1496 = vmatpush1.bf16.msra.mxu0 0
    %1497 = vmatprep.mubr.bf16.mxu0 0
    %1498 = vmatmul.mubr.bf16.gmra.mrb[0].mxu0 %v1463
    %v1499 = vpop.f32.mrb[0].mxu0
    %v1500 = vadd.f32 0.0, %v1499
    %v1501 = vpop.f32.mrb[0].mxu0
    %v1502 = vpop.f32.mrb[0].mxu0
    %v1503 = vpop.f32.mrb[0].mxu0
    %1504 = vdwg.mxu0
    %v1505 = vadd.f32 %v859, %v1500
    %v1506 = vxor.u32 %v1505, 2147483648
    %v1507 = vmul.f32 %v1506, 1.442695
    %v1508 = vpow.pop %v1507
    %v1509 = vadd.f32 %v1508, 1.0
    %v1510 = vrcp.pop %v1509
    %v1511 = vmul.f32 1.0, %v1510
    %v1512 = vtanh.pop %v1505
    %v1513 = vmul.f32 %v1511, %v1337
    %1515 = vrot.lane.b32.xlu0 %v1512, 64
    %v1516 = vpop.permute.xlu0 %1515
    %v1518 = vmul.f32 %v1511, %v1516
    %1520 = vrot.lane.b32.xlu0 %v1518, 32
    %v1521 = vpop.permute.xlu0 %1520
    %v1523 = vadd.f32 %v1513, %v1521
    %v1524 = vtanh.pop %v1523
    %1526 = vrot.lane.b32.xlu0 %v1524, 64
    %v1527 = vpop.permute.xlu0 %1526
    %v1529 = vmul.f32 %v1511, %v1527
    %v1531 = vcombine.high %v1529, %v1529
    %v1533 = vunpack.c.l.s4 1966171168
    %v1534 = vunpack.c.0.s8 %v1533
    %v1535 = vlaneseq
    %v1536 = vshrl.u32 %v1535, 7
    %v1537 = vsub.s32 %v1534, %v1536
    %v1538 = vrot.slane %v1529, %v1537
    %v1540 = vunpack.c.l.s4 1966171168
    %v1541 = vunpack.c.0.s8 %v1540
    %v1542 = vlaneseq
    %v1543 = vshrl.u32 %v1542, 7
    %v1544 = vsub.s32 %v1541, %v1543
    %v1545 = vrot.slane %v1531, %v1544
    %v1546 = vcombine.high %v1538, %v1538
    %v1547 = vcombine.high %v1545, %v1545
    %v1549 = vunpack.c.l.s4 1966171168
    %v1550 = vunpack.c.0.s8 %v1549
    %v1551 = vlaneseq
    %v1552 = vshrl.u32 %v1551, 7
    %v1553 = vsub.s32 %v1550, %v1552
    %v1554 = vrot.slane %v1538, %v1553
    %v1556 = vunpack.c.l.s4 1966171168
    %v1557 = vunpack.c.0.s8 %v1556
    %v1558 = vlaneseq
    %v1559 = vshrl.u32 %v1558, 7
    %v1560 = vsub.s32 %v1557, %v1559
    %v1561 = vrot.slane %v1545, %v1560
    %v1563 = vunpack.c.l.s4 1966171168
    %v1564 = vunpack.c.0.s8 %v1563
    %v1565 = vlaneseq
    %v1566 = vshrl.u32 %v1565, 7
    %v1567 = vsub.s32 %v1564, %v1566
    %v1568 = vrot.slane %v1546, %v1567
    %v1570 = vunpack.c.l.s4 1966171168
    %v1571 = vunpack.c.0.s8 %v1570
    %v1572 = vlaneseq
    %v1573 = vshrl.u32 %v1572, 7
    %v1574 = vsub.s32 %v1571, %v1573
    %v1575 = vrot.slane %v1547, %v1574
    %v1576 = vcombine.high %v1554, %v1554
    %v1577 = vcombine.high %v1561, %v1561
    %v1578 = vcombine.high %v1568, %v1568
    %v1579 = vcombine.high %v1575, %v1575
    %v1580 = vlaneseq
    %v1581 = vshrl.u32 %v1580, 7
    %v1582 = vsub.s32 0, %v1581
    %v1583 = vrot.slane %v1554, %v1582
    %v1584 = vlaneseq
    %v1585 = vshrl.u32 %v1584, 7
    %v1586 = vsub.s32 0, %v1585
    %v1587 = vrot.slane %v1568, %v1586
    %v1588 = vlaneseq
    %v1589 = vshrl.u32 %v1588, 7
    %v1590 = vsub.s32 0, %v1589
    %v1591 = vrot.slane %v1576, %v1590
    %v1592 = vlaneseq
    %v1593 = vshrl.u32 %v1592, 7
    %v1594 = vsub.s32 0, %v1593
    %v1595 = vrot.slane %v1578, %v1594
    %v1596 = vlaneseq
    %v1597 = vshrl.u32 %v1596, 7
    %v1598 = vsub.s32 0, %v1597
    %v1599 = vrot.slane %v1561, %v1598
    %v1600 = vlaneseq
    %v1601 = vshrl.u32 %v1600, 7
    %v1602 = vsub.s32 0, %v1601
    %v1603 = vrot.slane %v1575, %v1602
    %v1604 = vlaneseq
    %v1605 = vshrl.u32 %v1604, 7
    %v1606 = vsub.s32 0, %v1605
    %v1607 = vrot.slane %v1577, %v1606
    %v1608 = vlaneseq
    %v1609 = vshrl.u32 %v1608, 7
    %v1610 = vsub.s32 0, %v1609
    %v1611 = vrot.slane %v1579, %v1610
    %1612 = vrot.lane.b32.xlu0 %v1583, 32
    %v1613 = vpop.permute.xlu0 %1612
    %1614 = vrot.lane.b32.xlu0 %v1587, 32
    %v1615 = vpop.permute.xlu0 %1614
    %1616 = vrot.lane.b32.xlu0 %v1591, 32
    %v1617 = vpop.permute.xlu0 %1616
    %1618 = vrot.lane.b32.xlu0 %v1595, 32
    %v1619 = vpop.permute.xlu0 %1618
    %1620 = vrot.lane.b32.xlu0 %v1599, 32
    %v1621 = vpop.permute.xlu0 %1620
    %1622 = vrot.lane.b32.xlu0 %v1603, 32
    %v1623 = vpop.permute.xlu0 %1622
    %1624 = vrot.lane.b32.xlu0 %v1607, 32
    %v1625 = vpop.permute.xlu0 %1624
    %1626 = vrot.lane.b32.xlu0 %v1611, 32
    %v1627 = vpop.permute.xlu0 %1626
    %1636 = vst.msk [vmem:[#allocation2 + $0x3] sm:$0x1] %vm1077, %v1613
    %1637 = vst.msk [vmem:[#allocation2 + $0xb] sm:$0x1] %vm1077, %v1615
    %1638 = vst.msk [vmem:[#allocation2 + $0x13] sm:$0x1] %vm1077, %v1617
    %1639 = vst.msk [vmem:[#allocation2 + $0x1b] sm:$0x1] %vm1077, %v1619
    %1640 = vst.msk [vmem:[#allocation2 + $0x23] sm:$0x1] %vm1077, %v1621
    %1641 = vst.msk [vmem:[#allocation2 + $0x2b] sm:$0x1] %vm1077, %v1623
    %1642 = vst.msk [vmem:[#allocation2 + $0x33] sm:$0x1] %vm1077, %v1625
    %1643 = vst.msk [vmem:[#allocation2 + $0x3b] sm:$0x1] %vm1077, %v1627
    %v1644 = vpack.c.bf16 %v1529, %v1529
    %1646 = vrot.lane.b32.xlu0 %v1644, 32
    %v1647 = vpop.permute.xlu0 %1646
    %v1649 = vsel %vm79, %v1647, 0
    %1651 = vmatprep.subr.bf16.mxu0 0
    %1652 = vmatpush1.bf16.msra.mxu0 %v895
    %1653 = vmatprep.subr.bf16.mxu0 0
    %1654 = vmatpush1.bf16.msra.mxu0 %v896
    %1655 = vmatprep.subr.bf16.mxu0 0
    %1656 = vmatpush1.bf16.msra.mxu0 0
    %1657 = vmatprep.subr.bf16.mxu0 0
    %1658 = vmatpush1.bf16.msra.mxu0 0
    %1659 = vmatprep.subr.bf16.mxu0 0
    %1660 = vmatpush1.bf16.msra.mxu0 0
    %1661 = vmatprep.subr.bf16.mxu0 0
    %1662 = vmatpush1.bf16.msra.mxu0 0
    %1663 = vmatprep.subr.bf16.mxu0 0
    %1664 = vmatpush1.bf16.msra.mxu0 0
    %1665 = vmatprep.subr.bf16.mxu0 0
    %1666 = vmatpush1.bf16.msra.mxu0 0
    %1667 = vmatprep.subr.bf16.mxu0 0
    %1668 = vmatpush1.bf16.msra.mxu0 0
    %1669 = vmatprep.subr.bf16.mxu0 0
    %1670 = vmatpush1.bf16.msra.mxu0 0
    %1671 = vmatprep.subr.bf16.mxu0 0
    %1672 = vmatpush1.bf16.msra.mxu0 0
    %1673 = vmatprep.subr.bf16.mxu0 0
    %1674 = vmatpush1.bf16.msra.mxu0 0
    %1675 = vmatprep.subr.bf16.mxu0 0
    %1676 = vmatpush1.bf16.msra.mxu0 0
    %1677 = vmatprep.subr.bf16.mxu0 0
    %1678 = vmatpush1.bf16.msra.mxu0 0
    %1679 = vmatprep.subr.bf16.mxu0 0
    %1680 = vmatpush1.bf16.msra.mxu0 0
    %1681 = vmatprep.subr.bf16.mxu0 0
    %1682 = vmatpush1.bf16.msra.mxu0 0
    %1683 = vmatprep.mubr.bf16.mxu0 0
    %1684 = vmatmul.mubr.bf16.gmra.mrb[0].mxu0 %v1649
    %v1685 = vpop.f32.mrb[0].mxu0
    %v1686 = vadd.f32 0.0, %v1685
    %v1687 = vpop.f32.mrb[0].mxu0
    %v1688 = vpop.f32.mrb[0].mxu0
    %v1689 = vpop.f32.mrb[0].mxu0
    %1690 = vdwg.mxu0
    %v1691 = vadd.f32 %v864, %v1686
    %v1692 = vxor.u32 %v1691, 2147483648
    %v1693 = vmul.f32 %v1692, 1.442695
    %v1694 = vpow.pop %v1693
    %v1695 = vadd.f32 %v1694, 1.0
    %v1696 = vrcp.pop %v1695
    %v1697 = vmul.f32 1.0, %v1696
    %v1698 = vtanh.pop %v1691
    %v1699 = vmul.f32 %v1697, %v1523
    %1701 = vrot.lane.b32.xlu0 %v1698, 64
    %v1702 = vpop.permute.xlu0 %1701
    %v1704 = vmul.f32 %v1697, %v1702
    %1706 = vrot.lane.b32.xlu0 %v1704, 32
    %v1707 = vpop.permute.xlu0 %1706
    %v1709 = vadd.f32 %v1699, %v1707
    %v1710 = vtanh.pop %v1709
    %1712 = vrot.lane.b32.xlu0 %v1710, 64
    %v1713 = vpop.permute.xlu0 %1712
    %v1715 = vmul.f32 %v1697, %v1713
    %v1717 = vcombine.high %v1715, %v1715
    %v1719 = vunpack.c.l.s4 1966171168
    %v1720 = vunpack.c.0.s8 %v1719
    %v1721 = vlaneseq
    %v1722 = vshrl.u32 %v1721, 7
    %v1723 = vsub.s32 %v1720, %v1722
    %v1724 = vrot.slane %v1715, %v1723
    %v1726 = vunpack.c.l.s4 1966171168
    %v1727 = vunpack.c.0.s8 %v1726
    %v1728 = vlaneseq
    %v1729 = vshrl.u32 %v1728, 7
    %v1730 = vsub.s32 %v1727, %v1729
    %v1731 = vrot.slane %v1717, %v1730
    %v1732 = vcombine.high %v1724, %v1724
    %v1733 = vcombine.high %v1731, %v1731
    %v1735 = vunpack.c.l.s4 1966171168
    %v1736 = vunpack.c.0.s8 %v1735
    %v1737 = vlaneseq
    %v1738 = vshrl.u32 %v1737, 7
    %v1739 = vsub.s32 %v1736, %v1738
    %v1740 = vrot.slane %v1724, %v1739
    %v1742 = vunpack.c.l.s4 1966171168
    %v1743 = vunpack.c.0.s8 %v1742
    %v1744 = vlaneseq
    %v1745 = vshrl.u32 %v1744, 7
    %v1746 = vsub.s32 %v1743, %v1745
    %v1747 = vrot.slane %v1731, %v1746
    %v1749 = vunpack.c.l.s4 1966171168
    %v1750 = vunpack.c.0.s8 %v1749
    %v1751 = vlaneseq
    %v1752 = vshrl.u32 %v1751, 7
    %v1753 = vsub.s32 %v1750, %v1752
    %v1754 = vrot.slane %v1732, %v1753
    %v1756 = vunpack.c.l.s4 1966171168
    %v1757 = vunpack.c.0.s8 %v1756
    %v1758 = vlaneseq
    %v1759 = vshrl.u32 %v1758, 7
    %v1760 = vsub.s32 %v1757, %v1759
    %v1761 = vrot.slane %v1733, %v1760
    %v1762 = vcombine.high %v1740, %v1740
    %v1763 = vcombine.high %v1747, %v1747
    %v1764 = vcombine.high %v1754, %v1754
    %v1765 = vcombine.high %v1761, %v1761
    %v1766 = vlaneseq
    %v1767 = vshrl.u32 %v1766, 7
    %v1768 = vsub.s32 0, %v1767
    %v1769 = vrot.slane %v1740, %v1768
    %v1770 = vlaneseq
    %v1771 = vshrl.u32 %v1770, 7
    %v1772 = vsub.s32 0, %v1771
    %v1773 = vrot.slane %v1754, %v1772
    %v1774 = vlaneseq
    %v1775 = vshrl.u32 %v1774, 7
    %v1776 = vsub.s32 0, %v1775
    %v1777 = vrot.slane %v1762, %v1776
    %v1778 = vlaneseq
    %v1779 = vshrl.u32 %v1778, 7
    %v1780 = vsub.s32 0, %v1779
    %v1781 = vrot.slane %v1764, %v1780
    %v1782 = vlaneseq
    %v1783 = vshrl.u32 %v1782, 7
    %v1784 = vsub.s32 0, %v1783
    %v1785 = vrot.slane %v1747, %v1784
    %v1786 = vlaneseq
    %v1787 = vshrl.u32 %v1786, 7
    %v1788 = vsub.s32 0, %v1787
    %v1789 = vrot.slane %v1761, %v1788
    %v1790 = vlaneseq
    %v1791 = vshrl.u32 %v1790, 7
    %v1792 = vsub.s32 0, %v1791
    %v1793 = vrot.slane %v1763, %v1792
    %v1794 = vlaneseq
    %v1795 = vshrl.u32 %v1794, 7
    %v1796 = vsub.s32 0, %v1795
    %v1797 = vrot.slane %v1765, %v1796
    %1798 = vrot.lane.b32.xlu0 %v1769, 32
    %v1799 = vpop.permute.xlu0 %1798
    %1800 = vrot.lane.b32.xlu0 %v1773, 32
    %v1801 = vpop.permute.xlu0 %1800
    %1802 = vrot.lane.b32.xlu0 %v1777, 32
    %v1803 = vpop.permute.xlu0 %1802
    %1804 = vrot.lane.b32.xlu0 %v1781, 32
    %v1805 = vpop.permute.xlu0 %1804
    %1806 = vrot.lane.b32.xlu0 %v1785, 32
    %v1807 = vpop.permute.xlu0 %1806
    %1808 = vrot.lane.b32.xlu0 %v1789, 32
    %v1809 = vpop.permute.xlu0 %1808
    %1810 = vrot.lane.b32.xlu0 %v1793, 32
    %v1811 = vpop.permute.xlu0 %1810
    %1812 = vrot.lane.b32.xlu0 %v1797, 32
    %v1813 = vpop.permute.xlu0 %1812
    %1822 = vst.msk [vmem:[#allocation2 + $0x4] sm:$0x1] %vm1077, %v1799
    %1823 = vst.msk [vmem:[#allocation2 + $0xc] sm:$0x1] %vm1077, %v1801
    %1824 = vst.msk [vmem:[#allocation2 + $0x14] sm:$0x1] %vm1077, %v1803
    %1825 = vst.msk [vmem:[#allocation2 + $0x1c] sm:$0x1] %vm1077, %v1805
    %1826 = vst.msk [vmem:[#allocation2 + $0x24] sm:$0x1] %vm1077, %v1807
    %1827 = vst.msk [vmem:[#allocation2 + $0x2c] sm:$0x1] %vm1077, %v1809
    %1828 = vst.msk [vmem:[#allocation2 + $0x34] sm:$0x1] %vm1077, %v1811
    %1829 = vst.msk [vmem:[#allocation2 + $0x3c] sm:$0x1] %vm1077, %v1813
    %v1830 = vpack.c.bf16 %v1715, %v1715
    %1832 = vrot.lane.b32.xlu0 %v1830, 32
    %v1833 = vpop.permute.xlu0 %1832
    %v1835 = vsel %vm79, %v1833, 0
    %1837 = vmatprep.subr.bf16.mxu0 0
    %1838 = vmatpush1.bf16.msra.mxu0 %v895
    %1839 = vmatprep.subr.bf16.mxu0 0
    %1840 = vmatpush1.bf16.msra.mxu0 %v896
    %1841 = vmatprep.subr.bf16.mxu0 0
    %1842 = vmatpush1.bf16.msra.mxu0 0
    %1843 = vmatprep.subr.bf16.mxu0 0
    %1844 = vmatpush1.bf16.msra.mxu0 0
    %1845 = vmatprep.subr.bf16.mxu0 0
    %1846 = vmatpush1.bf16.msra.mxu0 0
    %1847 = vmatprep.subr.bf16.mxu0 0
    %1848 = vmatpush1.bf16.msra.mxu0 0
    %1849 = vmatprep.subr.bf16.mxu0 0
    %1850 = vmatpush1.bf16.msra.mxu0 0
    %1851 = vmatprep.subr.bf16.mxu0 0
    %1852 = vmatpush1.bf16.msra.mxu0 0
    %1853 = vmatprep.subr.bf16.mxu0 0
    %1854 = vmatpush1.bf16.msra.mxu0 0
    %1855 = vmatprep.subr.bf16.mxu0 0
    %1856 = vmatpush1.bf16.msra.mxu0 0
    %1857 = vmatprep.subr.bf16.mxu0 0
    %1858 = vmatpush1.bf16.msra.mxu0 0
    %1859 = vmatprep.subr.bf16.mxu0 0
    %1860 = vmatpush1.bf16.msra.mxu0 0
    %1861 = vmatprep.subr.bf16.mxu0 0
    %1862 = vmatpush1.bf16.msra.mxu0 0
    %1863 = vmatprep.subr.bf16.mxu0 0
    %1864 = vmatpush1.bf16.msra.mxu0 0
    %1865 = vmatprep.subr.bf16.mxu0 0
    %1866 = vmatpush1.bf16.msra.mxu0 0
    %1867 = vmatprep.subr.bf16.mxu0 0
    %1868 = vmatpush1.bf16.msra.mxu0 0
    %1869 = vmatprep.mubr.bf16.mxu0 0
    %1870 = vmatmul.mubr.bf16.gmra.mrb[0].mxu0 %v1835
    %v1871 = vpop.f32.mrb[0].mxu0
    %v1872 = vadd.f32 0.0, %v1871
    %v1873 = vpop.f32.mrb[0].mxu0
    %v1874 = vpop.f32.mrb[0].mxu0
    %v1875 = vpop.f32.mrb[0].mxu0
    %1876 = vdwg.mxu0
    %v1877 = vadd.f32 %v867, %v1872
    %v1878 = vxor.u32 %v1877, 2147483648
    %v1879 = vmul.f32 %v1878, 1.442695
    %v1880 = vpow.pop %v1879
    %v1881 = vadd.f32 %v1880, 1.0
    %v1882 = vrcp.pop %v1881
    %v1883 = vmul.f32 1.0, %v1882
    %v1884 = vtanh.pop %v1877
    %v1885 = vmul.f32 %v1883, %v1709
    %1887 = vrot.lane.b32.xlu0 %v1884, 64
    %v1888 = vpop.permute.xlu0 %1887
    %v1890 = vmul.f32 %v1883, %v1888
    %1892 = vrot.lane.b32.xlu0 %v1890, 32
    %v1893 = vpop.permute.xlu0 %1892
    %v1895 = vadd.f32 %v1885, %v1893
    %v1896 = vtanh.pop %v1895
    %1898 = vrot.lane.b32.xlu0 %v1896, 64
    %v1899 = vpop.permute.xlu0 %1898
    %v1901 = vmul.f32 %v1883, %v1899
    %v1903 = vcombine.high %v1901, %v1901
    %v1905 = vunpack.c.l.s4 1966171168
    %v1906 = vunpack.c.0.s8 %v1905
    %v1907 = vlaneseq
    %v1908 = vshrl.u32 %v1907, 7
    %v1909 = vsub.s32 %v1906, %v1908
    %v1910 = vrot.slane %v1901, %v1909
    %v1912 = vunpack.c.l.s4 1966171168
    %v1913 = vunpack.c.0.s8 %v1912
    %v1914 = vlaneseq
    %v1915 = vshrl.u32 %v1914, 7
    %v1916 = vsub.s32 %v1913, %v1915
    %v1917 = vrot.slane %v1903, %v1916
    %v1918 = vcombine.high %v1910, %v1910
    %v1919 = vcombine.high %v1917, %v1917
    %v1921 = vunpack.c.l.s4 1966171168
    %v1922 = vunpack.c.0.s8 %v1921
    %v1923 = vlaneseq
    %v1924 = vshrl.u32 %v1923, 7
    %v1925 = vsub.s32 %v1922, %v1924
    %v1926 = vrot.slane %v1910, %v1925
    %v1928 = vunpack.c.l.s4 1966171168
    %v1929 = vunpack.c.0.s8 %v1928
    %v1930 = vlaneseq
    %v1931 = vshrl.u32 %v1930, 7
    %v1932 = vsub.s32 %v1929, %v1931
    %v1933 = vrot.slane %v1917, %v1932
    %v1935 = vunpack.c.l.s4 1966171168
    %v1936 = vunpack.c.0.s8 %v1935
    %v1937 = vlaneseq
    %v1938 = vshrl.u32 %v1937, 7
    %v1939 = vsub.s32 %v1936, %v1938
    %v1940 = vrot.slane %v1918, %v1939
    %v1942 = vunpack.c.l.s4 1966171168
    %v1943 = vunpack.c.0.s8 %v1942
    %v1944 = vlaneseq
    %v1945 = vshrl.u32 %v1944, 7
    %v1946 = vsub.s32 %v1943, %v1945
    %v1947 = vrot.slane %v1919, %v1946
    %v1948 = vcombine.high %v1926, %v1926
    %v1949 = vcombine.high %v1933, %v1933
    %v1950 = vcombine.high %v1940, %v1940
    %v1951 = vcombine.high %v1947, %v1947
    %v1952 = vlaneseq
    %v1953 = vshrl.u32 %v1952, 7
    %v1954 = vsub.s32 0, %v1953
    %v1955 = vrot.slane %v1926, %v1954
    %v1956 = vlaneseq
    %v1957 = vshrl.u32 %v1956, 7
    %v1958 = vsub.s32 0, %v1957
    %v1959 = vrot.slane %v1940, %v1958
    %v1960 = vlaneseq
    %v1961 = vshrl.u32 %v1960, 7
    %v1962 = vsub.s32 0, %v1961
    %v1963 = vrot.slane %v1948, %v1962
    %v1964 = vlaneseq
    %v1965 = vshrl.u32 %v1964, 7
    %v1966 = vsub.s32 0, %v1965
    %v1967 = vrot.slane %v1950, %v1966
    %v1968 = vlaneseq
    %v1969 = vshrl.u32 %v1968, 7
    %v1970 = vsub.s32 0, %v1969
    %v1971 = vrot.slane %v1933, %v1970
    %v1972 = vlaneseq
    %v1973 = vshrl.u32 %v1972, 7
    %v1974 = vsub.s32 0, %v1973
    %v1975 = vrot.slane %v1947, %v1974
    %v1976 = vlaneseq
    %v1977 = vshrl.u32 %v1976, 7
    %v1978 = vsub.s32 0, %v1977
    %v1979 = vrot.slane %v1949, %v1978
    %v1980 = vlaneseq
    %v1981 = vshrl.u32 %v1980, 7
    %v1982 = vsub.s32 0, %v1981
    %v1983 = vrot.slane %v1951, %v1982
    %1984 = vrot.lane.b32.xlu0 %v1955, 32
    %v1985 = vpop.permute.xlu0 %1984
    %1986 = vrot.lane.b32.xlu0 %v1959, 32
    %v1987 = vpop.permute.xlu0 %1986
    %1988 = vrot.lane.b32.xlu0 %v1963, 32
    %v1989 = vpop.permute.xlu0 %1988
    %1990 = vrot.lane.b32.xlu0 %v1967, 32
    %v1991 = vpop.permute.xlu0 %1990
    %1992 = vrot.lane.b32.xlu0 %v1971, 32
    %v1993 = vpop.permute.xlu0 %1992
    %1994 = vrot.lane.b32.xlu0 %v1975, 32
    %v1995 = vpop.permute.xlu0 %1994
    %1996 = vrot.lane.b32.xlu0 %v1979, 32
    %v1997 = vpop.permute.xlu0 %1996
    %1998 = vrot.lane.b32.xlu0 %v1983, 32
    %v1999 = vpop.permute.xlu0 %1998
    %2008 = vst.msk [vmem:[#allocation2 + $0x5] sm:$0x1] %vm1077, %v1985
    %2009 = vst.msk [vmem:[#allocation2 + $0xd] sm:$0x1] %vm1077, %v1987
    %2010 = vst.msk [vmem:[#allocation2 + $0x15] sm:$0x1] %vm1077, %v1989
    %2011 = vst.msk [vmem:[#allocation2 + $0x1d] sm:$0x1] %vm1077, %v1991
    %2012 = vst.msk [vmem:[#allocation2 + $0x25] sm:$0x1] %vm1077, %v1993
    %2013 = vst.msk [vmem:[#allocation2 + $0x2d] sm:$0x1] %vm1077, %v1995
    %2014 = vst.msk [vmem:[#allocation2 + $0x35] sm:$0x1] %vm1077, %v1997
    %2015 = vst.msk [vmem:[#allocation2 + $0x3d] sm:$0x1] %vm1077, %v1999
    %v2016 = vpack.c.bf16 %v1901, %v1901
    %2018 = vrot.lane.b32.xlu0 %v2016, 32
    %v2019 = vpop.permute.xlu0 %2018
    %v2021 = vsel %vm79, %v2019, 0
    %2023 = vmatprep.subr.bf16.mxu0 0
    %2024 = vmatpush1.bf16.msra.mxu0 %v895
    %2025 = vmatprep.subr.bf16.mxu0 0
    %2026 = vmatpush1.bf16.msra.mxu0 %v896
    %2027 = vmatprep.subr.bf16.mxu0 0
    %2028 = vmatpush1.bf16.msra.mxu0 0
    %2029 = vmatprep.subr.bf16.mxu0 0
    %2030 = vmatpush1.bf16.msra.mxu0 0
    %2031 = vmatprep.subr.bf16.mxu0 0
    %2032 = vmatpush1.bf16.msra.mxu0 0
    %2033 = vmatprep.subr.bf16.mxu0 0
    %2034 = vmatpush1.bf16.msra.mxu0 0
    %2035 = vmatprep.subr.bf16.mxu0 0
    %2036 = vmatpush1.bf16.msra.mxu0 0
    %2037 = vmatprep.subr.bf16.mxu0 0
    %2038 = vmatpush1.bf16.msra.mxu0 0
    %2039 = vmatprep.subr.bf16.mxu0 0
    %2040 = vmatpush1.bf16.msra.mxu0 0
    %2041 = vmatprep.subr.bf16.mxu0 0
    %2042 = vmatpush1.bf16.msra.mxu0 0
    %2043 = vmatprep.subr.bf16.mxu0 0
    %2044 = vmatpush1.bf16.msra.mxu0 0
    %2045 = vmatprep.subr.bf16.mxu0 0
    %2046 = vmatpush1.bf16.msra.mxu0 0
    %2047 = vmatprep.subr.bf16.mxu0 0
    %2048 = vmatpush1.bf16.msra.mxu0 0
    %2049 = vmatprep.subr.bf16.mxu0 0
    %2050 = vmatpush1.bf16.msra.mxu0 0
    %2051 = vmatprep.subr.bf16.mxu0 0
    %2052 = vmatpush1.bf16.msra.mxu0 0
    %2053 = vmatprep.subr.bf16.mxu0 0
    %2054 = vmatpush1.bf16.msra.mxu0 0
    %2055 = vmatprep.mubr.bf16.mxu0 0
    %2056 = vmatmul.mubr.bf16.gmra.mrb[0].mxu0 %v2021
    %v2057 = vpop.f32.mrb[0].mxu0
    %v2058 = vadd.f32 0.0, %v2057
    %v2059 = vpop.f32.mrb[0].mxu0
    %v2060 = vpop.f32.mrb[0].mxu0
    %v2061 = vpop.f32.mrb[0].mxu0
    %2062 = vdwg.mxu0
    %v2063 = vadd.f32 %v872, %v2058
    %v2064 = vxor.u32 %v2063, 2147483648
    %v2065 = vmul.f32 %v2064, 1.442695
    %v2066 = vpow.pop %v2065
    %v2067 = vadd.f32 %v2066, 1.0
    %v2068 = vrcp.pop %v2067
    %v2069 = vmul.f32 1.0, %v2068
    %v2070 = vtanh.pop %v2063
    %v2071 = vmul.f32 %v2069, %v1895
    %2073 = vrot.lane.b32.xlu0 %v2070, 64
    %v2074 = vpop.permute.xlu0 %2073
    %v2076 = vmul.f32 %v2069, %v2074
    %2078 = vrot.lane.b32.xlu0 %v2076, 32
    %v2079 = vpop.permute.xlu0 %2078
    %v2081 = vadd.f32 %v2071, %v2079
    %v2082 = vtanh.pop %v2081
    %2084 = vrot.lane.b32.xlu0 %v2082, 64
    %v2085 = vpop.permute.xlu0 %2084
    %v2087 = vmul.f32 %v2069, %v2085
    %v2089 = vcombine.high %v2087, %v2087
    %v2091 = vunpack.c.l.s4 1966171168
    %v2092 = vunpack.c.0.s8 %v2091
    %v2093 = vlaneseq
    %v2094 = vshrl.u32 %v2093, 7
    %v2095 = vsub.s32 %v2092, %v2094
    %v2096 = vrot.slane %v2087, %v2095
    %v2098 = vunpack.c.l.s4 1966171168
    %v2099 = vunpack.c.0.s8 %v2098
    %v2100 = vlaneseq
    %v2101 = vshrl.u32 %v2100, 7
    %v2102 = vsub.s32 %v2099, %v2101
    %v2103 = vrot.slane %v2089, %v2102
    %v2104 = vcombine.high %v2096, %v2096
    %v2105 = vcombine.high %v2103, %v2103
    %v2107 = vunpack.c.l.s4 1966171168
    %v2108 = vunpack.c.0.s8 %v2107
    %v2109 = vlaneseq
    %v2110 = vshrl.u32 %v2109, 7
    %v2111 = vsub.s32 %v2108, %v2110
    %v2112 = vrot.slane %v2096, %v2111
    %v2114 = vunpack.c.l.s4 1966171168
    %v2115 = vunpack.c.0.s8 %v2114
    %v2116 = vlaneseq
    %v2117 = vshrl.u32 %v2116, 7
    %v2118 = vsub.s32 %v2115, %v2117
    %v2119 = vrot.slane %v2103, %v2118
    %v2121 = vunpack.c.l.s4 1966171168
    %v2122 = vunpack.c.0.s8 %v2121
    %v2123 = vlaneseq
    %v2124 = vshrl.u32 %v2123, 7
    %v2125 = vsub.s32 %v2122, %v2124
    %v2126 = vrot.slane %v2104, %v2125
    %v2128 = vunpack.c.l.s4 1966171168
    %v2129 = vunpack.c.0.s8 %v2128
    %v2130 = vlaneseq
    %v2131 = vshrl.u32 %v2130, 7
    %v2132 = vsub.s32 %v2129, %v2131
    %v2133 = vrot.slane %v2105, %v2132
    %v2134 = vcombine.high %v2112, %v2112
    %v2135 = vcombine.high %v2119, %v2119
    %v2136 = vcombine.high %v2126, %v2126
    %v2137 = vcombine.high %v2133, %v2133
    %v2138 = vlaneseq
    %v2139 = vshrl.u32 %v2138, 7
    %v2140 = vsub.s32 0, %v2139
    %v2141 = vrot.slane %v2112, %v2140
    %v2142 = vlaneseq
    %v2143 = vshrl.u32 %v2142, 7
    %v2144 = vsub.s32 0, %v2143
    %v2145 = vrot.slane %v2126, %v2144
    %v2146 = vlaneseq
    %v2147 = vshrl.u32 %v2146, 7
    %v2148 = vsub.s32 0, %v2147
    %v2149 = vrot.slane %v2134, %v2148
    %v2150 = vlaneseq
    %v2151 = vshrl.u32 %v2150, 7
    %v2152 = vsub.s32 0, %v2151
    %v2153 = vrot.slane %v2136, %v2152
    %v2154 = vlaneseq
    %v2155 = vshrl.u32 %v2154, 7
    %v2156 = vsub.s32 0, %v2155
    %v2157 = vrot.slane %v2119, %v2156
    %v2158 = vlaneseq
    %v2159 = vshrl.u32 %v2158, 7
    %v2160 = vsub.s32 0, %v2159
    %v2161 = vrot.slane %v2133, %v2160
    %v2162 = vlaneseq
    %v2163 = vshrl.u32 %v2162, 7
    %v2164 = vsub.s32 0, %v2163
    %v2165 = vrot.slane %v2135, %v2164
    %v2166 = vlaneseq
    %v2167 = vshrl.u32 %v2166, 7
    %v2168 = vsub.s32 0, %v2167
    %v2169 = vrot.slane %v2137, %v2168
    %2170 = vrot.lane.b32.xlu0 %v2141, 32
    %v2171 = vpop.permute.xlu0 %2170
    %2172 = vrot.lane.b32.xlu0 %v2145, 32
    %v2173 = vpop.permute.xlu0 %2172
    %2174 = vrot.lane.b32.xlu0 %v2149, 32
    %v2175 = vpop.permute.xlu0 %2174
    %2176 = vrot.lane.b32.xlu0 %v2153, 32
    %v2177 = vpop.permute.xlu0 %2176
    %2178 = vrot.lane.b32.xlu0 %v2157, 32
    %v2179 = vpop.permute.xlu0 %2178
    %2180 = vrot.lane.b32.xlu0 %v2161, 32
    %v2181 = vpop.permute.xlu0 %2180
    %2182 = vrot.lane.b32.xlu0 %v2165, 32
    %v2183 = vpop.permute.xlu0 %2182
    %2184 = vrot.lane.b32.xlu0 %v2169, 32
    %v2185 = vpop.permute.xlu0 %2184
    %2194 = vst.msk [vmem:[#allocation2 + $0x6] sm:$0x1] %vm1077, %v2171
    %2195 = vst.msk [vmem:[#allocation2 + $0xe] sm:$0x1] %vm1077, %v2173
    %2196 = vst.msk [vmem:[#allocation2 + $0x16] sm:$0x1] %vm1077, %v2175
    %2197 = vst.msk [vmem:[#allocation2 + $0x1e] sm:$0x1] %vm1077, %v2177
    %2198 = vst.msk [vmem:[#allocation2 + $0x26] sm:$0x1] %vm1077, %v2179
    %2199 = vst.msk [vmem:[#allocation2 + $0x2e] sm:$0x1] %vm1077, %v2181
    %2200 = vst.msk [vmem:[#allocation2 + $0x36] sm:$0x1] %vm1077, %v2183
    %2201 = vst.msk [vmem:[#allocation2 + $0x3e] sm:$0x1] %vm1077, %v2185
    %v2202 = vpack.c.bf16 %v2087, %v2087
    %2204 = vrot.lane.b32.xlu0 %v2202, 32
    %v2205 = vpop.permute.xlu0 %2204
    %v2207 = vsel %vm79, %v2205, 0
    %2209 = vmatprep.subr.bf16.mxu0 0
    %2210 = vmatpush1.bf16.msra.mxu0 %v895
    %2211 = vmatprep.subr.bf16.mxu0 0
    %2212 = vmatpush1.bf16.msra.mxu0 %v896
    %2213 = vmatprep.subr.bf16.mxu0 0
    %2214 = vmatpush1.bf16.msra.mxu0 0
    %2215 = vmatprep.subr.bf16.mxu0 0
    %2216 = vmatpush1.bf16.msra.mxu0 0
    %2217 = vmatprep.subr.bf16.mxu0 0
    %2218 = vmatpush1.bf16.msra.mxu0 0
    %2219 = vmatprep.subr.bf16.mxu0 0
    %2220 = vmatpush1.bf16.msra.mxu0 0
    %2221 = vmatprep.subr.bf16.mxu0 0
    %2222 = vmatpush1.bf16.msra.mxu0 0
    %2223 = vmatprep.subr.bf16.mxu0 0
    %2224 = vmatpush1.bf16.msra.mxu0 0
    %2225 = vmatprep.subr.bf16.mxu0 0
    %2226 = vmatpush1.bf16.msra.mxu0 0
    %2227 = vmatprep.subr.bf16.mxu0 0
    %2228 = vmatpush1.bf16.msra.mxu0 0
    %2229 = vmatprep.subr.bf16.mxu0 0
    %2230 = vmatpush1.bf16.msra.mxu0 0
    %2231 = vmatprep.subr.bf16.mxu0 0
    %2232 = vmatpush1.bf16.msra.mxu0 0
    %2233 = vmatprep.subr.bf16.mxu0 0
    %2234 = vmatpush1.bf16.msra.mxu0 0
    %2235 = vmatprep.subr.bf16.mxu0 0
    %2236 = vmatpush1.bf16.msra.mxu0 0
    %2237 = vmatprep.subr.bf16.mxu0 0
    %2238 = vmatpush1.bf16.msra.mxu0 0
    %2239 = vmatprep.subr.bf16.mxu0 0
    %2240 = vmatpush1.bf16.msra.mxu0 0
    %2241 = vmatprep.mubr.bf16.mxu0 0
    %2242 = vmatmul.mubr.bf16.gmra.mrb[0].mxu0 %v2207
    %v2243 = vpop.f32.mrb[0].mxu0
    %v2244 = vadd.f32 0.0, %v2243
    %v2245 = vpop.f32.mrb[0].mxu0
    %v2246 = vpop.f32.mrb[0].mxu0
    %v2247 = vpop.f32.mrb[0].mxu0
    %2248 = vdwg.mxu0
    %v2249 = vadd.f32 %v875, %v2244
    %v2250 = vxor.u32 %v2249, 2147483648
    %v2251 = vmul.f32 %v2250, 1.442695
    %v2252 = vpow.pop %v2251
    %v2253 = vadd.f32 %v2252, 1.0
    %v2254 = vrcp.pop %v2253
    %v2255 = vmul.f32 1.0, %v2254
    %v2256 = vtanh.pop %v2249
    %v2257 = vmul.f32 %v2255, %v2081
    %2259 = vrot.lane.b32.xlu0 %v2256, 64
    %v2260 = vpop.permute.xlu0 %2259
    %v2262 = vmul.f32 %v2255, %v2260
    %2264 = vrot.lane.b32.xlu0 %v2262, 32
    %v2265 = vpop.permute.xlu0 %2264
    %v2267 = vadd.f32 %v2257, %v2265
    %v2268 = vtanh.pop %v2267
    %2270 = vrot.lane.b32.xlu0 %v2268, 64
    %v2271 = vpop.permute.xlu0 %2270
    %v2273 = vmul.f32 %v2255, %v2271
    %v2275 = vcombine.high %v2273, %v2273
    %v2277 = vunpack.c.l.s4 1966171168
    %v2278 = vunpack.c.0.s8 %v2277
    %v2279 = vlaneseq
    %v2280 = vshrl.u32 %v2279, 7
    %v2281 = vsub.s32 %v2278, %v2280
    %v2282 = vrot.slane %v2273, %v2281
    %v2284 = vunpack.c.l.s4 1966171168
    %v2285 = vunpack.c.0.s8 %v2284
    %v2286 = vlaneseq
    %v2287 = vshrl.u32 %v2286, 7
    %v2288 = vsub.s32 %v2285, %v2287
    %v2289 = vrot.slane %v2275, %v2288
    %v2290 = vcombine.high %v2282, %v2282
    %v2291 = vcombine.high %v2289, %v2289
    %v2293 = vunpack.c.l.s4 1966171168
    %v2294 = vunpack.c.0.s8 %v2293
    %v2295 = vlaneseq
    %v2296 = vshrl.u32 %v2295, 7
    %v2297 = vsub.s32 %v2294, %v2296
    %v2298 = vrot.slane %v2282, %v2297
    %v2300 = vunpack.c.l.s4 1966171168
    %v2301 = vunpack.c.0.s8 %v2300
    %v2302 = vlaneseq
    %v2303 = vshrl.u32 %v2302, 7
    %v2304 = vsub.s32 %v2301, %v2303
    %v2305 = vrot.slane %v2289, %v2304
    %v2307 = vunpack.c.l.s4 1966171168
    %v2308 = vunpack.c.0.s8 %v2307
    %v2309 = vlaneseq
    %v2310 = vshrl.u32 %v2309, 7
    %v2311 = vsub.s32 %v2308, %v2310
    %v2312 = vrot.slane %v2290, %v2311
    %v2314 = vunpack.c.l.s4 1966171168
    %v2315 = vunpack.c.0.s8 %v2314
    %v2316 = vlaneseq
    %v2317 = vshrl.u32 %v2316, 7
    %v2318 = vsub.s32 %v2315, %v2317
    %v2319 = vrot.slane %v2291, %v2318
    %v2320 = vcombine.high %v2298, %v2298
    %v2321 = vcombine.high %v2305, %v2305
    %v2322 = vcombine.high %v2312, %v2312
    %v2323 = vcombine.high %v2319, %v2319
    %v2324 = vlaneseq
    %v2325 = vshrl.u32 %v2324, 7
    %v2326 = vsub.s32 0, %v2325
    %v2327 = vrot.slane %v2298, %v2326
    %v2328 = vlaneseq
    %v2329 = vshrl.u32 %v2328, 7
    %v2330 = vsub.s32 0, %v2329
    %v2331 = vrot.slane %v2312, %v2330
    %v2332 = vlaneseq
    %v2333 = vshrl.u32 %v2332, 7
    %v2334 = vsub.s32 0, %v2333
    %v2335 = vrot.slane %v2320, %v2334
    %v2336 = vlaneseq
    %v2337 = vshrl.u32 %v2336, 7
    %v2338 = vsub.s32 0, %v2337
    %v2339 = vrot.slane %v2322, %v2338
    %v2340 = vlaneseq
    %v2341 = vshrl.u32 %v2340, 7
    %v2342 = vsub.s32 0, %v2341
    %v2343 = vrot.slane %v2305, %v2342
    %v2344 = vlaneseq
    %v2345 = vshrl.u32 %v2344, 7
    %v2346 = vsub.s32 0, %v2345
    %v2347 = vrot.slane %v2319, %v2346
    %v2348 = vlaneseq
    %v2349 = vshrl.u32 %v2348, 7
    %v2350 = vsub.s32 0, %v2349
    %v2351 = vrot.slane %v2321, %v2350
    %v2352 = vlaneseq
    %v2353 = vshrl.u32 %v2352, 7
    %v2354 = vsub.s32 0, %v2353
    %v2355 = vrot.slane %v2323, %v2354
    %2356 = vrot.lane.b32.xlu0 %v2327, 32
    %v2357 = vpop.permute.xlu0 %2356
    %2358 = vrot.lane.b32.xlu0 %v2331, 32
    %v2359 = vpop.permute.xlu0 %2358
    %2360 = vrot.lane.b32.xlu0 %v2335, 32
    %v2361 = vpop.permute.xlu0 %2360
    %2362 = vrot.lane.b32.xlu0 %v2339, 32
    %v2363 = vpop.permute.xlu0 %2362
    %2364 = vrot.lane.b32.xlu0 %v2343, 32
    %v2365 = vpop.permute.xlu0 %2364
    %2366 = vrot.lane.b32.xlu0 %v2347, 32
    %v2367 = vpop.permute.xlu0 %2366
    %2368 = vrot.lane.b32.xlu0 %v2351, 32
    %v2369 = vpop.permute.xlu0 %2368
    %2370 = vrot.lane.b32.xlu0 %v2355, 32
    %v2371 = vpop.permute.xlu0 %2370
    %2380 = vst.msk [vmem:[#allocation2 + $0x7] sm:$0x1] %vm1077, %v2357
    %2381 = vst.msk [vmem:[#allocation2 + $0xf] sm:$0x1] %vm1077, %v2359
    %2382 = vst.msk [vmem:[#allocation2 + $0x17] sm:$0x1] %vm1077, %v2361
    %2383 = vst.msk [vmem:[#allocation2 + $0x1f] sm:$0x1] %vm1077, %v2363
    %2384 = vst.msk [vmem:[#allocation2 + $0x27] sm:$0x1] %vm1077, %v2365
    %2385 = vst.msk [vmem:[#allocation2 + $0x2f] sm:$0x1] %vm1077, %v2367
    %2386 = vst.msk [vmem:[#allocation2 + $0x37] sm:$0x1] %vm1077, %v2369
    %2387 = vst.msk [vmem:[#allocation2 + $0x3f] sm:$0x1] %vm1077, %v2371
    %2388 = vrot.lane.b32.xlu0 %v2273, 32
    %v2389 = vpop.permute.xlu0 %2388
    %s2391 = scalar_lea.vmem [#allocation5], 8
    %2392 = vst.msk [vmem:[%s2391] sm:$0xff] %vm79, %v2389
    %2394 = vrot.lane.b32.xlu0 %v2267, 96
    %v2395 = vpop.permute.xlu0 %2394
    %s2397 = scalar_lea.vmem [#allocation7], 8
    %2398 = vst.msk [vmem:[%s2397] sm:$0xff] %vm79, %v2395
    %v2399 = vld [vmem:[#allocation2] sm:$0xff]
    %v2400 = vld [vmem:[#allocation2 + $0x8] sm:$0xff]
    %v2401 = vld [vmem:[#allocation2 + $0x10] sm:$0xff]
    %v2402 = vld [vmem:[#allocation2 + $0x18] sm:$0xff]
    %v2403 = vld [vmem:[#allocation2 + $0x20] sm:$0xff]
    %v2404 = vld [vmem:[#allocation2 + $0x28] sm:$0xff]
    %v2405 = vld [vmem:[#allocation2 + $0x30] sm:$0xff]
    %v2406 = vld [vmem:[#allocation2 + $0x38] sm:$0xff]
    %v2407 = vpack.c.bf16 %v2400, %v2399
    %v2408 = vpack.c.bf16 %v2402, %v2401
    %v2409 = vpack.c.bf16 %v2404, %v2403
    %v2410 = vpack.c.bf16 %v2406, %v2405
    %v2411 = vld [vmem:[%s7] sm:$0xf]
    %v2412 = vld [vmem:[%s7 + $0x4] sm:$0xf]
    %v2413 = vld [vmem:[%s7 + $0x8] sm:$0xf]
    %v2414 = vld [vmem:[%s7 + $0xc] sm:$0xf]
    %v2415 = vld [vmem:[%s8] sm:$0x1]
    %v2417 = vlaneseq
    %v2418 = vshrl.u32 %v2417, 7
    %v2419 = vsub.s32 0, %v2418
    %v2420 = vrot.slane %v2415, %v2419
    %v2426 = vunpack.c.l.b16 %v2411
    %v2427 = vunpack.c.l.b16 %v2412
    %v2428 = vunpack.c.l.b16 %v2413
    %v2429 = vunpack.c.l.b16 %v2414
    %v2430 = vpack.c.b16 %v2427, %v2426
    %v2431 = vpack.c.b16 %v2429, %v2428
    %v2435 = vsel %vm79, %v2407, 0
    %v2438 = vsel %vm79, %v2408, 0
    %v2441 = vsel %vm79, %v2409, 0
    %v2444 = vsel %vm79, %v2410, 0
    %2446 = vmatprep.subr.bf16.mxu0 0
    %2447 = vmatpush1.bf16.msra.mxu0 %v2430
    %2448 = vmatprep.subr.bf16.mxu0 0
    %2449 = vmatpush1.bf16.msra.mxu0 %v2431
    %2450 = vmatprep.subr.bf16.mxu0 0
    %2451 = vmatpush1.bf16.msra.mxu0 0
    %2452 = vmatprep.subr.bf16.mxu0 0
    %2453 = vmatpush1.bf16.msra.mxu0 0
    %2454 = vmatprep.subr.bf16.mxu0 0
    %2455 = vmatpush1.bf16.msra.mxu0 0
    %2456 = vmatprep.subr.bf16.mxu0 0
    %2457 = vmatpush1.bf16.msra.mxu0 0
    %2458 = vmatprep.subr.bf16.mxu0 0
    %2459 = vmatpush1.bf16.msra.mxu0 0
    %2460 = vmatprep.subr.bf16.mxu0 0
    %2461 = vmatpush1.bf16.msra.mxu0 0
    %2462 = vmatprep.subr.bf16.mxu0 0
    %2463 = vmatpush1.bf16.msra.mxu0 0
    %2464 = vmatprep.subr.bf16.mxu0 0
    %2465 = vmatpush1.bf16.msra.mxu0 0
    %2466 = vmatprep.subr.bf16.mxu0 0
    %2467 = vmatpush1.bf16.msra.mxu0 0
    %2468 = vmatprep.subr.bf16.mxu0 0
    %2469 = vmatpush1.bf16.msra.mxu0 0
    %2470 = vmatprep.subr.bf16.mxu0 0
    %2471 = vmatpush1.bf16.msra.mxu0 0
    %2472 = vmatprep.subr.bf16.mxu0 0
    %2473 = vmatpush1.bf16.msra.mxu0 0
    %2474 = vmatprep.subr.bf16.mxu0 0
    %2475 = vmatpush1.bf16.msra.mxu0 0
    %2476 = vmatprep.subr.bf16.mxu0 0
    %2477 = vmatpush1.bf16.msra.mxu0 0
    %2478 = vmatprep.mubr.bf16.mxu0 0
    %2479 = vmatmul.mubr.bf16.gmra.mrb[0].mxu0 %v2435
    %v2480 = vpop.f32.mrb[0].mxu0
    %v2481 = vadd.f32 %v2420, %v2480
    %v2482 = vpop.f32.mrb[0].mxu0
    %v2483 = vpop.f32.mrb[0].mxu0
    %v2484 = vadd.f32 %v2420, %v2483
    %v2485 = vpop.f32.mrb[0].mxu0
    %2486 = vmatprep.mubr.bf16.mxu0 0
    %2487 = vmatmul.mubr.bf16.gmra.mrb[0].mxu0 %v2438
    %v2488 = vpop.f32.mrb[0].mxu0
    %v2489 = vadd.f32 %v2420, %v2488
    %v2490 = vpop.f32.mrb[0].mxu0
    %v2491 = vpop.f32.mrb[0].mxu0
    %v2492 = vadd.f32 %v2420, %v2491
    %v2493 = vpop.f32.mrb[0].mxu0
    %2494 = vmatprep.mubr.bf16.mxu0 0
    %2495 = vmatmul.mubr.bf16.gmra.mrb[0].mxu0 %v2441
    %v2496 = vpop.f32.mrb[0].mxu0
    %v2497 = vadd.f32 %v2420, %v2496
    %v2498 = vpop.f32.mrb[0].mxu0
    %v2499 = vpop.f32.mrb[0].mxu0
    %v2500 = vadd.f32 %v2420, %v2499
    %v2501 = vpop.f32.mrb[0].mxu0
    %2502 = vmatprep.mubr.bf16.mxu0 0
    %2503 = vmatmul.mubr.bf16.gmra.mrb[0].mxu0 %v2444
    %v2504 = vpop.f32.mrb[0].mxu0
    %v2505 = vadd.f32 %v2420, %v2504
    %v2506 = vpop.f32.mrb[0].mxu0
    %v2507 = vpop.f32.mrb[0].mxu0
    %v2508 = vadd.f32 %v2420, %v2507
    %v2509 = vpop.f32.mrb[0].mxu0
    %2510 = vdwg.mxu0
    %2511 = vst [vmem:[#allocation3] sm:$0xff] %v2481
    %2512 = vst [vmem:[#allocation3 + $0x8] sm:$0xff] %v2484
    %2513 = vst [vmem:[#allocation3 + $0x10] sm:$0xff] %v2489
    %2514 = vst [vmem:[#allocation3 + $0x18] sm:$0xff] %v2492
    %2515 = vst [vmem:[#allocation3 + $0x20] sm:$0xff] %v2497
    %2516 = vst [vmem:[#allocation3 + $0x28] sm:$0xff] %v2500
    %2517 = vst [vmem:[#allocation3 + $0x30] sm:$0xff] %v2505
    %2518 = vst [vmem:[#allocation3 + $0x38] sm:$0xff] %v2508
    // Predicated region
    $region46: #{char_rnn_forward.1} parent=1 // pred_check
      _
    $region47: #{char_rnn_forward.1} parent=1 // pred_check_branch
      %2520 = sbr.rel (0) target = $region49
    $region48: #{char_rnn_forward.1} parent=1 // pred_region
      %s2522 = ssub.s32 1024, 1024
      %2523 = vsyncadd [#allocation4], %s2522
      %s2524 = sshll.u32 [#allocation3], 4
      %s2525 = int_to_ptr.vmem [resolvable:$true] %s2524
      %2530 = dma.vmem_to_hbm [thread:$0]  %s2525, 1024, %s11, [#allocation4], 128, 128, 8
    $region49: #{char_rnn_forward.1} parent=1 // pred_fallthru
      _
    // Predicated region
    $region50: #{char_rnn_forward.1} parent=1 // pred_check
      _
    $region51: #{char_rnn_forward.1} parent=1 // pred_check_branch
      %2532 = sbr.rel (0) target = $region53
    $region52: #{char_rnn_forward.1} parent=1 // pred_region
      %s2534 = ssub.s32 256, 256
      %2535 = vsyncadd [#allocation6], %s2534
      %s2536 = sshll.u32 [#allocation5], 4
      %s2537 = int_to_ptr.vmem [resolvable:$true] %s2536
      %2542 = dma.vmem_to_hbm [thread:$0]  %s2537, 256, %s12, [#allocation6], 128, 128, 8
    $region53: #{char_rnn_forward.1} parent=1 // pred_fallthru
      _
    // Predicated region
    $region54: #{char_rnn_forward.1} parent=1 // pred_check
      _
    $region55: #{char_rnn_forward.1} parent=1 // pred_check_branch
      %2544 = sbr.rel (0) target = $region57
    $region56: #{char_rnn_forward.1} parent=1 // pred_region
      %s2546 = ssub.s32 256, 256
      %2547 = vsyncadd [#allocation6], %s2546
      %s2548 = sshll.u32 [#allocation7], 4
      %s2549 = int_to_ptr.vmem [resolvable:$true] %s2548
      %2554 = dma.vmem_to_hbm [thread:$0]  %s2549, 256, %s13, [#allocation6], 128, 128, 8
    $region57: #{char_rnn_forward.1} parent=1 // pred_fallthru
      _
    // Predicated region
    $region58: #{char_rnn_forward.1} parent=1 // pred_check
      _
    $region59: #{char_rnn_forward.1} parent=1 // pred_check_branch
      %2556 = sbr.rel (0) target = $region61
    $region60: #{char_rnn_forward.1} parent=1 // pred_region
      %2557 = dma.done [#allocation4], 1024
    $region61: #{char_rnn_forward.1} parent=1 // pred_fallthru
      _
    // Predicated region
    $region62: #{char_rnn_forward.1} parent=1 // pred_check
      _
    $region63: #{char_rnn_forward.1} parent=1 // pred_check_branch
      %2559 = sbr.rel (0) target = $region65
    $region64: #{char_rnn_forward.1} parent=1 // pred_region
      %2560 = dma.done [#allocation6], 256
    $region65: #{char_rnn_forward.1} parent=1 // pred_fallthru
      _
    // Predicated region
    $region66: #{char_rnn_forward.1} parent=1 // pred_check
      _
    $region67: #{char_rnn_forward.1} parent=1 // pred_check_branch
      %2562 = sbr.rel (0) target = $region69
    $region68: #{char_rnn_forward.1} parent=1 // pred_region
      %2563 = dma.done [#allocation6], 256
    $region69: #{char_rnn_forward.1} parent=1 // pred_fallthru
      _
    %2564 = vsyncpa [#allocation4], 1
    %2565 = vsyncpa [#allocation6], 1

</llo_original>
